<compile_context>
chip_gen: v7x
topology: tpu7x:2x2x1
jax: 0.10.0
libtpu: 0.0.40
codegen_flags: <defaults>
</compile_context>

<pallas_src>
import functools

import jax
import jax.numpy as jnp
from jax import lax
from jax.experimental import pallas as pl
from jax.experimental.pallas import tpu as pltpu


def linear_permute_kernel(x_ref, w_ref, b_ref, o_ref):
    # x_ref: (M, Cin) f32  -- constant index_map => DMA'd once, stays resident.
    # w_ref: (tn, Cin) bf16 weight tile (streamed, double-buffered by Pallas).
    # b_ref: (tn, 1) f32 bias tile.
    # o_ref: (tn, M) f32   -- channel-major output == the permuted layout.
    x_bf = x_ref[...].astype(jnp.bfloat16)  # cheap VPU cast, hidden under DMA
    acc = lax.dot_general(
        w_ref[...],
        x_bf,
        dimension_numbers=(((1,), (1,)), ((), ())),  # contract Cin on both sides
        preferred_element_type=jnp.float32,
    )
    o_ref[...] = (acc + b_ref[...]).astype(o_ref.dtype)


@functools.partial(jax.jit, static_argnames=("tn",))
def linear_permute(x_nhwc, weight_bf16, bias, *, tn=192):
    """x_nhwc: (B, H, W, Cin) f32; weight_bf16: (Cout, Cin) bf16 (torch layout,
    pre-converted once); bias: (Cout,) f32.
    Returns (B, Cout, H, W) f32 == torch.permute(linear(x), [0, 3, 1, 2])."""
    B, H, W, Cin = x_nhwc.shape
    Cout, Cin_w = weight_bf16.shape
    assert Cin == Cin_w
    assert Cout % tn == 0, (Cout, tn)
    M = B * H * W

    x2d = x_nhwc.reshape(M, Cin)                       # metadata only
    b2d = bias.astype(jnp.float32).reshape(Cout, 1)    # metadata only

    flops = 2 * M * Cout * Cin
    bytes_accessed = (M * Cin * 4) + (Cout * Cin * 2) + (Cout * 4) + (Cout * M * 4)

    out_t = pl.pallas_call(
        linear_permute_kernel,
        out_shape=jax.ShapeDtypeStruct((Cout, M), jnp.float32),
        grid=(Cout // tn,),
        in_specs=[
            # Full activation block, constant index map -> DMA'd once, resident.
            pl.BlockSpec((M, Cin), lambda j: (0, 0)),
            # Weight streamed in (tn, Cin) tiles -> DMA overlaps MXU across j.
            pl.BlockSpec((tn, Cin), lambda j: (j, 0)),
            # Matching bias tile (column vector for the (tn, M) output layout).
            pl.BlockSpec((tn, 1), lambda j: (j, 0)),
        ],
        out_specs=pl.BlockSpec((tn, M), lambda j: (j, 0)),
        compiler_params=pltpu.CompilerParams(
            # Disjoint output tiles per step: safe to shard Cout across the two
            # TensorCores on v7x; plain pipelined loop on v5e/v6e.
            dimension_semantics=("parallel",),
        ),
        cost_estimate=pl.CostEstimate(
            flops=flops, transcendentals=0, bytes_accessed=bytes_accessed),
    )(x2d, weight_bf16, b2d)

    # (Cout, B*H*W) is already channel-major: only metadata ops remain for B==1.
    # NOTE: for B > 1 this moveaxis becomes a real HBM transpose.
    out = out_t.reshape(Cout, B, H, W)
    return jnp.moveaxis(out, 1, 0)  # (B, Cout, H, W)

    # TODO(synk): if this layer runs repeatedly, keep the bf16 weight resident
    # in VMEM across calls (cross-call prefetch / P10) to drop the ~1.2 MB
    # per-call weight DMA (~55% of this kernel's HBM bytes).


if __name__ == "__main__":
    # Shapes implied by the module: x145 = (1, 14, 14, 1536), Linear(1536, 384).
    B, H, W, Cin, Cout = 1, 14, 14, 1536, 384

    key = jax.random.PRNGKey(0)
    kx, kw, kb = jax.random.split(key, 3)

    # Deterministic init mimicking torch.nn.Linear (uniform +-1/sqrt(Cin)).
    bound = 1.0 / (Cin ** 0.5)
    weight = jax.random.uniform(kw, (Cout, Cin), jnp.float32, -bound, bound)
    bias = jax.random.uniform(kb, (Cout,), jnp.float32, -bound, bound)
    x = jax.random.normal(kx, (B, H, W, Cin), jnp.float32)

    # One-time persistent bf16 conversion of the weight (not per call).
    weight_bf16 = weight.astype(jnp.bfloat16)

    out = jax.block_until_ready(linear_permute(x, weight_bf16, bias))
    assert out.shape == (B, Cout, H, W), out.shape

    # Reference in plain JAX (f32). bf16 operands with f32 accumulation over
    # K=1536 land around 1e-2 absolute/relative error vs the f32 reference.
    ref = jnp.transpose(jnp.einsum("bhwk,nk->bhwn", x, weight) + bias, (0, 3, 1, 2))
    max_err = float(jnp.max(jnp.abs(out - ref)))
    assert jnp.allclose(out, ref, atol=3e-2, rtol=3e-2), max_err

    print("KERNEL_OK")
</pallas_src>

<mosaic_0001>
module attributes {stable_mosaic.version = 11 : i64} {
  func.func @linear_permute_kernel(%arg0: i32, %arg1: memref<196x1536xf32, #tpu.memory_space<vmem>>, %arg2: memref<192x1536xbf16, #tpu.memory_space<vmem>>, %arg3: memref<192x1xf32, #tpu.memory_space<vmem>>, %arg4: memref<192x196xf32, #tpu.memory_space<vmem>>) attributes {dimension_semantics = [#tpu.dimension_semantics<parallel>], iteration_bounds = array<i64: 2>, scalar_prefetch = 0 : i64, scratch_operands = 0 : i64, tpu.core_type = #tpu.core_type<tc>, window_params = [{pipeline_mode = #tpu.pipeline_mode<synchronous>, transform_indices = @transform_0, window_bounds = array<i64: 196, 1536>}, {transform_indices = @transform_1, window_bounds = array<i64: 192, 1536>}, {transform_indices = @transform_2, window_bounds = array<i64: 192, 1>}, {transform_indices = @transform_3, window_bounds = array<i64: 192, 196>}]} {
    %c0 = arith.constant 0 : index
    %c0_0 = arith.constant 0 : index
    %0 = vector.load %arg1[%c0, %c0_0] : memref<196x1536xf32, #tpu.memory_space<vmem>>, vector<196x1536xf32>
    %1 = arith.truncf %0 : vector<196x1536xf32> to vector<196x1536xbf16>
    %c0_1 = arith.constant 0 : index
    %c0_2 = arith.constant 0 : index
    %2 = vector.load %arg2[%c0_1, %c0_2] : memref<192x1536xbf16, #tpu.memory_space<vmem>>, vector<192x1536xbf16>
    %cst = arith.constant dense<0.000000e+00> : vector<192x196xf32>
    %3 = tpu.matmul %2, %1, %cst {dimension_numbers = #tpu.dot_dimension_numbers<[1], [1], [0], [0], [0, 0, 1, 0], [], []>} : vector<192x1536xbf16>, vector<196x1536xbf16>, vector<192x196xf32> -> vector<192x196xf32>
    %c0_3 = arith.constant 0 : index
    %c0_4 = arith.constant 0 : index
    %4 = vector.load %arg3[%c0_3, %c0_4] : memref<192x1xf32, #tpu.memory_space<vmem>>, vector<192x1xf32>
    %5 = vector.broadcast %4 : vector<192x1xf32> to vector<192x196xf32>
    %6 = arith.addf %3, %5 : vector<192x196xf32>
    %c0_5 = arith.constant 0 : index
    %c0_6 = arith.constant 0 : index
    %7 = vector.load %arg4[%c0_5, %c0_6] : memref<192x196xf32, #tpu.memory_space<vmem>>, vector<192x196xf32>
    tpu.vector_store %arg4[%c0_5, %c0_6], %6 {strides = array<i32>} : memref<192x196xf32, #tpu.memory_space<vmem>>, vector<192x196xf32>,
    return
  }
  func.func @transform_0(%arg0: i32) -> (i32, i32) {
    %c0_i32 = arith.constant 0 : i32
    %c0_i32_0 = arith.constant 0 : i32
    %c0_i32_1 = arith.constant 0 : i32
    return %c0_i32, %c0_i32_0 : i32, i32
  }
  func.func @transform_1(%arg0: i32) -> (i32, i32) {
    %c0_i32 = arith.constant 0 : i32
    %c0_i32_0 = arith.constant 0 : i32
    return %arg0, %c0_i32 : i32, i32
  }
  func.func @transform_2(%arg0: i32) -> (i32, i32) {
    %c0_i32 = arith.constant 0 : i32
    %c0_i32_0 = arith.constant 0 : i32
    return %arg0, %c0_i32 : i32, i32
  }
  func.func @transform_3(%arg0: i32) -> (i32, i32) {
    %c0_i32 = arith.constant 0 : i32
    %c0_i32_0 = arith.constant 0 : i32
    return %arg0, %c0_i32 : i32, i32
  }
}

</mosaic_0001>

<llo_original>
// kernel: linear_permute.1
$region0: #{linear_permute.1}
  #allocation0 [shape = 'u32[]', space=smem, size = 0x4, offset = 0x4, fixed_abs, tag = 'smem constant byte address 0x4 - core index']
  #allocation1 [shape = 'u32[144,128]{1,0:T(1,128)}', space=vmem, size = 0x12000, scoped, tag = 'internal scratch']
  %s0 = inlined_call_operand.vmem [shape: f32[196,1536], index: 0, kind: input, shape index: {}]
  %s1 = inlined_call_operand.vmem [shape: bf16[384,1536], index: 1, kind: input, shape index: {}]
  %s2 = inlined_call_operand.vmem [shape: f32[384,1], index: 2, kind: input, shape index: {}]
  %s3 = inlined_call_operand.vmem [shape: f32[384,196], index: 3, kind: output, shape index: {}]
  %s4 = sld [smem:[#allocation0]]
  $region45: #{linear_permute.1} parent=0
    _
  %s6 = ssub.s32 1, %s4
  %s7 = scalar_select 0, %s6, %s4
  loop: start=0, step=1, limit=4
  $region2: #{linear_permute.1} parent=0 // loop_pre_header
    _
  $region3: #{linear_permute.1} parent=0 // loop_header
    %s9 = sphi 0, %s13
    %p10 = scmp.ge.s32.totalorder %s9, 4
    %s17 = sphi 0, %s17
    %s19 = sphi 0, %s17
    %s20 = sphi 0, %s19
    %s34 = sphi 0, %s20
    %s40 = sphi 0, %s42
    %s43 = sphi 0, %s40
    %s44 = sphi 0, %s43
    %s60 = sphi 0, %s44
    %s66 = sphi 0, %s68
    %s69 = sphi 0, %s66
    %s70 = sphi 0, %s69
    %s86 = sphi 0, %s70
    %s92 = sphi 0, %s94
    %s95 = sphi 0, %s92
    %s96 = sphi 0, %s95
    %s112 = sphi 0, %s96
  $region4: #{linear_permute.1} parent=0 // loop_header_branch
    %12 = sbr.rel (%p10) target = $region8
  $region5: #{linear_permute.1} parent=0 // loop_body
    %s14 = ssub.s32 %s9, 1
    %s15 = ssub.s32 %s9, 2
    %s16 = sadd.s32 %s9, 1
    %s18 = sadd.s32 %s17, 1
    %p21 = scmp.eq.s32.totalorder %s9, 1
    %p22 = scmp.ne.s32.totalorder %s17, %s19
    %p23 = scmp.eq.s32.totalorder %s9, 0
    %p24 = por %p22, %p23
    %p25 = scmp.ne.s32.totalorder %s17, %s19
    %p26 = scmp.eq.s32.totalorder %s14, 1
    %p27 = por %p25, %p26
    %p28 = scmp.ne.s32.totalorder %s19, %s20
    %p29 = scmp.eq.s32.totalorder %s14, 0
    %p30 = por %p28, %p29
    %p31 = scmp.ne.s32.totalorder %s19, %s20
    %p32 = scmp.eq.s32.totalorder %s15, 1
    %p33 = por %p31, %p32
    %p35 = scmp.ne.s32.totalorder %s20, %s34
    %p36 = scmp.eq.s32.totalorder %s15, 0
    %p37 = por %p35, %p36
    %s38 = ssub.s32 %s9, %s16
    %p39 = scmp.eq.s32.totalorder %s38, 0
    %s41 = sadd.s32 %s40, 1
    %s42 = scalar_select %p39, %s40, %s41
    %p45 = pneg %p39
    %p46 = scmp.eq.s32.totalorder %s9, 1
    %p47 = por %p45, %p46
    %p48 = scmp.ne.s32.totalorder %s40, %s43
    %p49 = scmp.eq.s32.totalorder %s9, 0
    %p50 = por %p48, %p49
    %p51 = scmp.ne.s32.totalorder %s40, %s43
    %p52 = scmp.eq.s32.totalorder %s14, 1
    %p53 = por %p51, %p52
    %p54 = scmp.ne.s32.totalorder %s43, %s44
    %p55 = scmp.eq.s32.totalorder %s14, 0
    %p56 = por %p54, %p55
    %p57 = scmp.ne.s32.totalorder %s43, %s44
    %p58 = scmp.eq.s32.totalorder %s15, 1
    %p59 = por %p57, %p58
    %p61 = scmp.ne.s32.totalorder %s44, %s60
    %p62 = scmp.eq.s32.totalorder %s15, 0
    %p63 = por %p61, %p62
    %s64 = ssub.s32 %s9, %s16
    %p65 = scmp.eq.s32.totalorder %s64, 0
    %s67 = sadd.s32 %s66, 1
    %s68 = scalar_select %p65, %s66, %s67
    %p71 = pneg %p65
    %p72 = scmp.eq.s32.totalorder %s9, 1
    %p73 = por %p71, %p72
    %p74 = scmp.ne.s32.totalorder %s66, %s69
    %p75 = scmp.eq.s32.totalorder %s9, 0
    %p76 = por %p74, %p75
    %p77 = scmp.ne.s32.totalorder %s66, %s69
    %p78 = scmp.eq.s32.totalorder %s14, 1
    %p79 = por %p77, %p78
    %p80 = scmp.ne.s32.totalorder %s69, %s70
    %p81 = scmp.eq.s32.totalorder %s14, 0
    %p82 = por %p80, %p81
    %p83 = scmp.ne.s32.totalorder %s69, %s70
    %p84 = scmp.eq.s32.totalorder %s15, 1
    %p85 = por %p83, %p84
    %p87 = scmp.ne.s32.totalorder %s70, %s86
    %p88 = scmp.eq.s32.totalorder %s15, 0
    %p89 = por %p87, %p88
    %s90 = ssub.s32 %s9, %s16
    %p91 = scmp.eq.s32.totalorder %s90, 0
    %s93 = sadd.s32 %s92, 1
    %s94 = scalar_select %p91, %s92, %s93
    %p97 = pneg %p91
    %p98 = scmp.eq.s32.totalorder %s9, 1
    %p99 = por %p97, %p98
    %p100 = scmp.ne.s32.totalorder %s92, %s95
    %p101 = scmp.eq.s32.totalorder %s9, 0
    %p102 = por %p100, %p101
    %p103 = scmp.ne.s32.totalorder %s92, %s95
    %p104 = scmp.eq.s32.totalorder %s14, 1
    %p105 = por %p103, %p104
    %p106 = scmp.ne.s32.totalorder %s95, %s96
    %p107 = scmp.eq.s32.totalorder %s14, 0
    %p108 = por %p106, %p107
    %p109 = scmp.ne.s32.totalorder %s95, %s96
    %p110 = scmp.eq.s32.totalorder %s15, 1
    %p111 = por %p109, %p110
    %p113 = scmp.ne.s32.totalorder %s96, %s112
    %p114 = scmp.eq.s32.totalorder %s15, 0
    %p115 = por %p113, %p114
    %p116 = scmp.le.s32.totalorder 1, %s9
    %p117 = scmp.lt.s32.totalorder %s9, 3
    %p118 = pnand %p116, %p117
    %p119 = pneg %p118
    // Predicated region
    $region9: #{linear_permute.1} parent=5 // pred_check
      _
    $region10: #{linear_permute.1} parent=5 // pred_check_branch
      %121 = sbr.rel (%p118) target = $region12
    $region11: #{linear_permute.1} parent=5 // pred_region
      %s122 = ssub.s32 %s9, 1
      // Predicated region
      $region13: #{linear_permute.1} parent=11 // pred_check
        %p123 = pneg %p30
      $region14: #{linear_permute.1} parent=11 // pred_check_branch
        %125 = sbr.rel (%p123) target = $region16
      $region15: #{linear_permute.1} parent=11 // pred_region
        _
      $region16: #{linear_permute.1} parent=11 // pred_fallthru
        _
    $region12: #{linear_permute.1} parent=5 // pred_fallthru
      _
    %p126 = scmp.lt.s32.totalorder %s9, 2
    // Predicated region
    $region17: #{linear_permute.1} parent=5 // pred_check
      %p127 = pneg %p126
    $region18: #{linear_permute.1} parent=5 // pred_check_branch
      %129 = sbr.rel (%p127) target = $region20
    $region19: #{linear_permute.1} parent=5 // pred_region
      // Predicated region
      $region21: #{linear_permute.1} parent=19 // pred_check
        %p130 = pneg %p50
      $region22: #{linear_permute.1} parent=19 // pred_check_branch
        %132 = sbr.rel (%p130) target = $region24
      $region23: #{linear_permute.1} parent=19 // pred_region
        %s133 = smul.u32 24, %s9
        %p134 = scmp.lt.s32.totalorder %s133, 47
        %s135 = scalar_select %p134, %s133, 47
        %s136 = smul.addr %s135, 12
        %s137 = smul.addr %s136, 4
        %s138 = scalar_lea.vmem %s1, %s137
        %s139 = smul.u32 24, %s9
      $region24: #{linear_permute.1} parent=19 // pred_fallthru
        _
      // Predicated region
      $region25: #{linear_permute.1} parent=19 // pred_check
        %p140 = pneg %p76
      $region26: #{linear_permute.1} parent=19 // pred_check_branch
        %142 = sbr.rel (%p140) target = $region28
      $region27: #{linear_permute.1} parent=19 // pred_region
        %s143 = smul.u32 24, %s9
        %p144 = scmp.lt.s32.totalorder %s143, 47
        %s145 = scalar_select %p144, %s143, 47
        %s146 = smul.addr %s145, 8
        %s147 = scalar_lea.vmem %s2, %s146
        %s148 = smul.u32 24, %s9
      $region28: #{linear_permute.1} parent=19 // pred_fallthru
        _
    $region20: #{linear_permute.1} parent=5 // pred_fallthru
      _
    %p149 = scmp.le.s32.totalorder 1, %s9
    %p150 = scmp.lt.s32.totalorder %s9, 3
    %p151 = pnand %p149, %p150
    %p152 = pneg %p151
    // Predicated region
    $region29: #{linear_permute.1} parent=5 // pred_check
      _
    $region30: #{linear_permute.1} parent=5 // pred_check_branch
      %154 = sbr.rel (%p151) target = $region32
    $region31: #{linear_permute.1} parent=5 // pred_region
      %s155 = ssub.s32 %s9, 1
      %p156 = pneg %p30
      %p157 = pneg %p27
      %s158 = smul.u32 24, %s14
      %p159 = scmp.lt.s32.totalorder %s158, 47
      %s160 = scalar_select %p159, %s158, 47
      %s161 = smul.addr %s160, 12
      %s162 = smul.addr %s161, 4
      %s163 = scalar_lea.vmem %s1, %s162
      %p164 = pneg %p56
      %p165 = pneg %p53
      %s166 = smul.u32 24, %s14
      %p167 = scmp.lt.s32.totalorder %s166, 47
      %s168 = scalar_select %p167, %s166, 47
      %s169 = smul.addr %s168, 8
      %s170 = scalar_lea.vmem %s2, %s169
      %p171 = pneg %p82
      %p172 = pneg %p79
      %p173 = pneg %p108
      %p174 = pneg %p105
      %s175 = smul.u32 24, %s14
      %p176 = scmp.lt.s32.totalorder %s175, 47
      %s177 = scalar_select %p176, %s175, 47
      %s178 = smul.addr %s177, 2
      %s179 = smul.addr %s178, 8
      %s180 = scalar_lea.vmem %s3, %s179
      %s181 = smul.u32 24, %s14
      %p182 = scmp.lt.s32.totalorder %s181, 47
      %s183 = scalar_select %p182, %s181, 47
      %s184 = smul.addr %s183, 12
      %s185 = smul.addr %s184, 4
      %s186 = scalar_lea.vmem %s1, %s185
      %s187 = smul.u32 24, %s14
      %s188 = smul.u32 24, %s14
      %p189 = scmp.lt.s32.totalorder %s188, 47
      %s190 = scalar_select %p189, %s188, 47
      %s191 = smul.addr %s190, 8
      %s192 = scalar_lea.vmem %s2, %s191
      %s193 = smul.u32 24, %s14
      %s194 = smul.u32 24, %s14
      %p195 = scmp.lt.s32.totalorder %s194, 47
      %s196 = scalar_select %p195, %s194, 47
      %s197 = smul.addr %s196, 2
      %s198 = smul.addr %s197, 8
      %s199 = scalar_lea.vmem %s3, %s198
      %s200 = smul.u32 24, %s14
      %v202 = vld [vmem:[%s0] sm:$0xff]
      %v203 = vld [vmem:[%s0 + $0x8] sm:$0xff]
      %v204 = vld [vmem:[%s0 + $0x10] sm:$0xff]
      %v205 = vld [vmem:[%s0 + $0x18] sm:$0xff]
      %v206 = vld [vmem:[%s0 + $0x20] sm:$0xff]
      %v207 = vld [vmem:[%s0 + $0x28] sm:$0xff]
      %v208 = vld [vmem:[%s0 + $0x30] sm:$0xff]
      %v209 = vld [vmem:[%s0 + $0x38] sm:$0xff]
      %v210 = vld [vmem:[%s0 + $0x40] sm:$0xff]
      %v211 = vld [vmem:[%s0 + $0x48] sm:$0xff]
      %v212 = vld [vmem:[%s0 + $0x50] sm:$0xff]
      %v213 = vld [vmem:[%s0 + $0x58] sm:$0xff]
      %v214 = vld [vmem:[%s0 + $0x60] sm:$0xff]
      %v215 = vld [vmem:[%s0 + $0x68] sm:$0xff]
      %v216 = vld [vmem:[%s0 + $0x70] sm:$0xff]
      %v217 = vld [vmem:[%s0 + $0x78] sm:$0xff]
      %v218 = vld [vmem:[%s0 + $0x80] sm:$0xff]
      %v219 = vld [vmem:[%s0 + $0x88] sm:$0xff]
      %v220 = vld [vmem:[%s0 + $0x90] sm:$0xff]
      %v221 = vld [vmem:[%s0 + $0x98] sm:$0xff]
      %v222 = vld [vmem:[%s0 + $0xa0] sm:$0xff]
      %v223 = vld [vmem:[%s0 + $0xa8] sm:$0xff]
      %v224 = vld [vmem:[%s0 + $0xb0] sm:$0xff]
      %v225 = vld [vmem:[%s0 + $0xb8] sm:$0xff]
      %v226 = vld [vmem:[%s0 + $0xc0] sm:$0xff]
      %v227 = vld [vmem:[%s0 + $0xc8] sm:$0xff]
      %v228 = vld [vmem:[%s0 + $0xd0] sm:$0xff]
      %v229 = vld [vmem:[%s0 + $0xd8] sm:$0xff]
      %v230 = vld [vmem:[%s0 + $0xe0] sm:$0xff]
      %v231 = vld [vmem:[%s0 + $0xe8] sm:$0xff]
      %v232 = vld [vmem:[%s0 + $0xf0] sm:$0xff]
      %v233 = vld [vmem:[%s0 + $0xf8] sm:$0xff]
      %v234 = vld [vmem:[%s0 + $0x100] sm:$0xff]
      %v235 = vld [vmem:[%s0 + $0x108] sm:$0xff]
      %v236 = vld [vmem:[%s0 + $0x110] sm:$0xff]
      %v237 = vld [vmem:[%s0 + $0x118] sm:$0xff]
      %v238 = vld [vmem:[%s0 + $0x120] sm:$0xff]
      %v239 = vld [vmem:[%s0 + $0x128] sm:$0xff]
      %v240 = vld [vmem:[%s0 + $0x130] sm:$0xff]
      %v241 = vld [vmem:[%s0 + $0x138] sm:$0xff]
      %v242 = vld [vmem:[%s0 + $0x140] sm:$0xff]
      %v243 = vld [vmem:[%s0 + $0x148] sm:$0xff]
      %v244 = vld [vmem:[%s0 + $0x150] sm:$0xff]
      %v245 = vld [vmem:[%s0 + $0x158] sm:$0xff]
      %v246 = vld [vmem:[%s0 + $0x160] sm:$0xff]
      %v247 = vld [vmem:[%s0 + $0x168] sm:$0xff]
      %v248 = vld [vmem:[%s0 + $0x170] sm:$0xff]
      %v249 = vld [vmem:[%s0 + $0x178] sm:$0xff]
      %v250 = vld [vmem:[%s0 + $0x180] sm:$0xff]
      %v251 = vld [vmem:[%s0 + $0x188] sm:$0xff]
      %v252 = vld [vmem:[%s0 + $0x190] sm:$0xff]
      %v253 = vld [vmem:[%s0 + $0x198] sm:$0xff]
      %v254 = vld [vmem:[%s0 + $0x1a0] sm:$0xff]
      %v255 = vld [vmem:[%s0 + $0x1a8] sm:$0xff]
      %v256 = vld [vmem:[%s0 + $0x1b0] sm:$0xff]
      %v257 = vld [vmem:[%s0 + $0x1b8] sm:$0xff]
      %v258 = vld [vmem:[%s0 + $0x1c0] sm:$0xff]
      %v259 = vld [vmem:[%s0 + $0x1c8] sm:$0xff]
      %v260 = vld [vmem:[%s0 + $0x1d0] sm:$0xff]
      %v261 = vld [vmem:[%s0 + $0x1d8] sm:$0xff]
      %v262 = vld [vmem:[%s0 + $0x1e0] sm:$0xff]
      %v263 = vld [vmem:[%s0 + $0x1e8] sm:$0xff]
      %v264 = vld [vmem:[%s0 + $0x1f0] sm:$0xff]
      %v265 = vld [vmem:[%s0 + $0x1f8] sm:$0xff]
      %v266 = vld [vmem:[%s0 + $0x200] sm:$0xff]
      %v267 = vld [vmem:[%s0 + $0x208] sm:$0xff]
      %v268 = vld [vmem:[%s0 + $0x210] sm:$0xff]
      %v269 = vld [vmem:[%s0 + $0x218] sm:$0xff]
      %v270 = vld [vmem:[%s0 + $0x220] sm:$0xff]
      %v271 = vld [vmem:[%s0 + $0x228] sm:$0xff]
      %v272 = vld [vmem:[%s0 + $0x230] sm:$0xff]
      %v273 = vld [vmem:[%s0 + $0x238] sm:$0xff]
      %v274 = vld [vmem:[%s0 + $0x240] sm:$0xff]
      %v275 = vld [vmem:[%s0 + $0x248] sm:$0xff]
      %v276 = vld [vmem:[%s0 + $0x250] sm:$0xff]
      %v277 = vld [vmem:[%s0 + $0x258] sm:$0xff]
      %v278 = vld [vmem:[%s0 + $0x260] sm:$0xff]
      %v279 = vld [vmem:[%s0 + $0x268] sm:$0xff]
      %v280 = vld [vmem:[%s0 + $0x270] sm:$0xff]
      %v281 = vld [vmem:[%s0 + $0x278] sm:$0xff]
      %v282 = vld [vmem:[%s0 + $0x280] sm:$0xff]
      %v283 = vld [vmem:[%s0 + $0x288] sm:$0xff]
      %v284 = vld [vmem:[%s0 + $0x290] sm:$0xff]
      %v285 = vld [vmem:[%s0 + $0x298] sm:$0xff]
      %v286 = vld [vmem:[%s0 + $0x2a0] sm:$0xff]
      %v287 = vld [vmem:[%s0 + $0x2a8] sm:$0xff]
      %v288 = vld [vmem:[%s0 + $0x2b0] sm:$0xff]
      %v289 = vld [vmem:[%s0 + $0x2b8] sm:$0xff]
      %v290 = vld [vmem:[%s0 + $0x2c0] sm:$0xff]
      %v291 = vld [vmem:[%s0 + $0x2c8] sm:$0xff]
      %v292 = vld [vmem:[%s0 + $0x2d0] sm:$0xff]
      %v293 = vld [vmem:[%s0 + $0x2d8] sm:$0xff]
      %v294 = vld [vmem:[%s0 + $0x2e0] sm:$0xff]
      %v295 = vld [vmem:[%s0 + $0x2e8] sm:$0xff]
      %v296 = vld [vmem:[%s0 + $0x2f0] sm:$0xff]
      %v297 = vld [vmem:[%s0 + $0x2f8] sm:$0xff]
      %v298 = vld [vmem:[%s0 + $0x300] sm:$0xff]
      %v299 = vld [vmem:[%s0 + $0x308] sm:$0xff]
      %v300 = vld [vmem:[%s0 + $0x310] sm:$0xff]
      %v301 = vld [vmem:[%s0 + $0x318] sm:$0xff]
      %v302 = vld [vmem:[%s0 + $0x320] sm:$0xff]
      %v303 = vld [vmem:[%s0 + $0x328] sm:$0xff]
      %v304 = vld [vmem:[%s0 + $0x330] sm:$0xff]
      %v305 = vld [vmem:[%s0 + $0x338] sm:$0xff]
      %v306 = vld [vmem:[%s0 + $0x340] sm:$0xff]
      %v307 = vld [vmem:[%s0 + $0x348] sm:$0xff]
      %v308 = vld [vmem:[%s0 + $0x350] sm:$0xff]
      %v309 = vld [vmem:[%s0 + $0x358] sm:$0xff]
      %v310 = vld [vmem:[%s0 + $0x360] sm:$0xff]
      %v311 = vld [vmem:[%s0 + $0x368] sm:$0xff]
      %v312 = vld [vmem:[%s0 + $0x370] sm:$0xff]
      %v313 = vld [vmem:[%s0 + $0x378] sm:$0xff]
      %v314 = vld [vmem:[%s0 + $0x380] sm:$0xff]
      %v315 = vld [vmem:[%s0 + $0x388] sm:$0xff]
      %v316 = vld [vmem:[%s0 + $0x390] sm:$0xff]
      %v317 = vld [vmem:[%s0 + $0x398] sm:$0xff]
      %v318 = vld [vmem:[%s0 + $0x3a0] sm:$0xff]
      %v319 = vld [vmem:[%s0 + $0x3a8] sm:$0xff]
      %v320 = vld [vmem:[%s0 + $0x3b0] sm:$0xff]
      %v321 = vld [vmem:[%s0 + $0x3b8] sm:$0xff]
      %v322 = vld [vmem:[%s0 + $0x3c0] sm:$0xff]
      %v323 = vld [vmem:[%s0 + $0x3c8] sm:$0xff]
      %v324 = vld [vmem:[%s0 + $0x3d0] sm:$0xff]
      %v325 = vld [vmem:[%s0 + $0x3d8] sm:$0xff]
      %v326 = vld [vmem:[%s0 + $0x3e0] sm:$0xff]
      %v327 = vld [vmem:[%s0 + $0x3e8] sm:$0xff]
      %v328 = vld [vmem:[%s0 + $0x3f0] sm:$0xff]
      %v329 = vld [vmem:[%s0 + $0x3f8] sm:$0xff]
      %v330 = vld [vmem:[%s0 + $0x400] sm:$0xff]
      %v331 = vld [vmem:[%s0 + $0x408] sm:$0xff]
      %v332 = vld [vmem:[%s0 + $0x410] sm:$0xff]
      %v333 = vld [vmem:[%s0 + $0x418] sm:$0xff]
      %v334 = vld [vmem:[%s0 + $0x420] sm:$0xff]
      %v335 = vld [vmem:[%s0 + $0x428] sm:$0xff]
      %v336 = vld [vmem:[%s0 + $0x430] sm:$0xff]
      %v337 = vld [vmem:[%s0 + $0x438] sm:$0xff]
      %v338 = vld [vmem:[%s0 + $0x440] sm:$0xff]
      %v339 = vld [vmem:[%s0 + $0x448] sm:$0xff]
      %v340 = vld [vmem:[%s0 + $0x450] sm:$0xff]
      %v341 = vld [vmem:[%s0 + $0x458] sm:$0xff]
      %v342 = vld [vmem:[%s0 + $0x460] sm:$0xff]
      %v343 = vld [vmem:[%s0 + $0x468] sm:$0xff]
      %v344 = vld [vmem:[%s0 + $0x470] sm:$0xff]
      %v345 = vld [vmem:[%s0 + $0x478] sm:$0xff]
      %v346 = vld [vmem:[%s0 + $0x480] sm:$0xff]
      %v347 = vld [vmem:[%s0 + $0x488] sm:$0xff]
      %v348 = vld [vmem:[%s0 + $0x490] sm:$0xff]
      %v349 = vld [vmem:[%s0 + $0x498] sm:$0xff]
      %v350 = vld [vmem:[%s0 + $0x4a0] sm:$0xff]
      %v351 = vld [vmem:[%s0 + $0x4a8] sm:$0xff]
      %v352 = vld [vmem:[%s0 + $0x4b0] sm:$0xff]
      %v353 = vld [vmem:[%s0 + $0x4b8] sm:$0xff]
      %v354 = vld [vmem:[%s0 + $0x4c0] sm:$0xff]
      %v355 = vld [vmem:[%s0 + $0x4c8] sm:$0xff]
      %v356 = vld [vmem:[%s0 + $0x4d0] sm:$0xff]
      %v357 = vld [vmem:[%s0 + $0x4d8] sm:$0xff]
      %v358 = vld [vmem:[%s0 + $0x4e0] sm:$0xff]
      %v359 = vld [vmem:[%s0 + $0x4e8] sm:$0xff]
      %v360 = vld [vmem:[%s0 + $0x4f0] sm:$0xff]
      %v361 = vld [vmem:[%s0 + $0x4f8] sm:$0xff]
      %v362 = vld [vmem:[%s0 + $0x500] sm:$0xff]
      %v363 = vld [vmem:[%s0 + $0x508] sm:$0xff]
      %v364 = vld [vmem:[%s0 + $0x510] sm:$0xff]
      %v365 = vld [vmem:[%s0 + $0x518] sm:$0xff]
      %v366 = vld [vmem:[%s0 + $0x520] sm:$0xff]
      %v367 = vld [vmem:[%s0 + $0x528] sm:$0xff]
      %v368 = vld [vmem:[%s0 + $0x530] sm:$0xff]
      %v369 = vld [vmem:[%s0 + $0x538] sm:$0xff]
      %v370 = vld [vmem:[%s0 + $0x540] sm:$0xff]
      %v371 = vld [vmem:[%s0 + $0x548] sm:$0xff]
      %v372 = vld [vmem:[%s0 + $0x550] sm:$0xff]
      %v373 = vld [vmem:[%s0 + $0x558] sm:$0xff]
      %v374 = vld [vmem:[%s0 + $0x560] sm:$0xff]
      %v375 = vld [vmem:[%s0 + $0x568] sm:$0xff]
      %v376 = vld [vmem:[%s0 + $0x570] sm:$0xff]
      %v377 = vld [vmem:[%s0 + $0x578] sm:$0xff]
      %v378 = vld [vmem:[%s0 + $0x580] sm:$0xff]
      %v379 = vld [vmem:[%s0 + $0x588] sm:$0xff]
      %v380 = vld [vmem:[%s0 + $0x590] sm:$0xff]
      %v381 = vld [vmem:[%s0 + $0x598] sm:$0xff]
      %v382 = vld [vmem:[%s0 + $0x5a0] sm:$0xff]
      %v383 = vld [vmem:[%s0 + $0x5a8] sm:$0xff]
      %v384 = vld [vmem:[%s0 + $0x5b0] sm:$0xff]
      %v385 = vld [vmem:[%s0 + $0x5b8] sm:$0xff]
      %v386 = vld [vmem:[%s0 + $0x5c0] sm:$0xff]
      %v387 = vld [vmem:[%s0 + $0x5c8] sm:$0xff]
      %v388 = vld [vmem:[%s0 + $0x5d0] sm:$0xff]
      %v389 = vld [vmem:[%s0 + $0x5d8] sm:$0xff]
      %v390 = vld [vmem:[%s0 + $0x5e0] sm:$0xff]
      %v391 = vld [vmem:[%s0 + $0x5e8] sm:$0xff]
      %v392 = vld [vmem:[%s0 + $0x5f0] sm:$0xff]
      %v393 = vld [vmem:[%s0 + $0x5f8] sm:$0xff]
      %v394 = vld [vmem:[%s0 + $0x600] sm:$0xff]
      %v395 = vld [vmem:[%s0 + $0x608] sm:$0xff]
      %v396 = vld [vmem:[%s0 + $0x610] sm:$0xff]
      %v397 = vld [vmem:[%s0 + $0x618] sm:$0xff]
      %v398 = vld [vmem:[%s0 + $0x620] sm:$0xff]
      %v399 = vld [vmem:[%s0 + $0x628] sm:$0xff]
      %v400 = vld [vmem:[%s0 + $0x630] sm:$0xff]
      %v401 = vld [vmem:[%s0 + $0x638] sm:$0xff]
      %v402 = vld [vmem:[%s0 + $0x640] sm:$0xff]
      %v403 = vld [vmem:[%s0 + $0x648] sm:$0xff]
      %v404 = vld [vmem:[%s0 + $0x650] sm:$0xff]
      %v405 = vld [vmem:[%s0 + $0x658] sm:$0xff]
      %v406 = vld [vmem:[%s0 + $0x660] sm:$0xff]
      %v407 = vld [vmem:[%s0 + $0x668] sm:$0xff]
      %v408 = vld [vmem:[%s0 + $0x670] sm:$0xff]
      %v409 = vld [vmem:[%s0 + $0x678] sm:$0xff]
      %v410 = vld [vmem:[%s0 + $0x680] sm:$0xff]
      %v411 = vld [vmem:[%s0 + $0x688] sm:$0xff]
      %v412 = vld [vmem:[%s0 + $0x690] sm:$0xff]
      %v413 = vld [vmem:[%s0 + $0x698] sm:$0xff]
      %v414 = vld [vmem:[%s0 + $0x6a0] sm:$0xff]
      %v415 = vld [vmem:[%s0 + $0x6a8] sm:$0xff]
      %v416 = vld [vmem:[%s0 + $0x6b0] sm:$0xff]
      %v417 = vld [vmem:[%s0 + $0x6b8] sm:$0xff]
      %v418 = vld [vmem:[%s0 + $0x6c0] sm:$0xff]
      %v419 = vld [vmem:[%s0 + $0x6c8] sm:$0xff]
      %v420 = vld [vmem:[%s0 + $0x6d0] sm:$0xff]
      %v421 = vld [vmem:[%s0 + $0x6d8] sm:$0xff]
      %v422 = vld [vmem:[%s0 + $0x6e0] sm:$0xff]
      %v423 = vld [vmem:[%s0 + $0x6e8] sm:$0xff]
      %v424 = vld [vmem:[%s0 + $0x6f0] sm:$0xff]
      %v425 = vld [vmem:[%s0 + $0x6f8] sm:$0xff]
      %v426 = vld [vmem:[%s0 + $0x700] sm:$0xff]
      %v427 = vld [vmem:[%s0 + $0x708] sm:$0xff]
      %v428 = vld [vmem:[%s0 + $0x710] sm:$0xff]
      %v429 = vld [vmem:[%s0 + $0x718] sm:$0xff]
      %v430 = vld [vmem:[%s0 + $0x720] sm:$0xff]
      %v431 = vld [vmem:[%s0 + $0x728] sm:$0xff]
      %v432 = vld [vmem:[%s0 + $0x730] sm:$0xff]
      %v433 = vld [vmem:[%s0 + $0x738] sm:$0xff]
      %v434 = vld [vmem:[%s0 + $0x740] sm:$0xff]
      %v435 = vld [vmem:[%s0 + $0x748] sm:$0xff]
      %v436 = vld [vmem:[%s0 + $0x750] sm:$0xff]
      %v437 = vld [vmem:[%s0 + $0x758] sm:$0xff]
      %v438 = vld [vmem:[%s0 + $0x760] sm:$0xff]
      %v439 = vld [vmem:[%s0 + $0x768] sm:$0xff]
      %v440 = vld [vmem:[%s0 + $0x770] sm:$0xff]
      %v441 = vld [vmem:[%s0 + $0x778] sm:$0xff]
      %v442 = vld [vmem:[%s0 + $0x780] sm:$0xff]
      %v443 = vld [vmem:[%s0 + $0x788] sm:$0xff]
      %v444 = vld [vmem:[%s0 + $0x790] sm:$0xff]
      %v445 = vld [vmem:[%s0 + $0x798] sm:$0xff]
      %v446 = vld [vmem:[%s0 + $0x7a0] sm:$0xff]
      %v447 = vld [vmem:[%s0 + $0x7a8] sm:$0xff]
      %v448 = vld [vmem:[%s0 + $0x7b0] sm:$0xff]
      %v449 = vld [vmem:[%s0 + $0x7b8] sm:$0xff]
      %v450 = vld [vmem:[%s0 + $0x7c0] sm:$0xff]
      %v451 = vld [vmem:[%s0 + $0x7c8] sm:$0xff]
      %v452 = vld [vmem:[%s0 + $0x7d0] sm:$0xff]
      %v453 = vld [vmem:[%s0 + $0x7d8] sm:$0xff]
      %v454 = vld [vmem:[%s0 + $0x7e0] sm:$0xff]
      %v455 = vld [vmem:[%s0 + $0x7e8] sm:$0xff]
      %v456 = vld [vmem:[%s0 + $0x7f0] sm:$0xff]
      %v457 = vld [vmem:[%s0 + $0x7f8] sm:$0xff]
      %v458 = vld [vmem:[%s0 + $0x800] sm:$0xff]
      %v459 = vld [vmem:[%s0 + $0x808] sm:$0xff]
      %v460 = vld [vmem:[%s0 + $0x810] sm:$0xff]
      %v461 = vld [vmem:[%s0 + $0x818] sm:$0xff]
      %v462 = vld [vmem:[%s0 + $0x820] sm:$0xff]
      %v463 = vld [vmem:[%s0 + $0x828] sm:$0xff]
      %v464 = vld [vmem:[%s0 + $0x830] sm:$0xff]
      %v465 = vld [vmem:[%s0 + $0x838] sm:$0xff]
      %v466 = vld [vmem:[%s0 + $0x840] sm:$0xff]
      %v467 = vld [vmem:[%s0 + $0x848] sm:$0xff]
      %v468 = vld [vmem:[%s0 + $0x850] sm:$0xff]
      %v469 = vld [vmem:[%s0 + $0x858] sm:$0xff]
      %v470 = vld [vmem:[%s0 + $0x860] sm:$0xff]
      %v471 = vld [vmem:[%s0 + $0x868] sm:$0xff]
      %v472 = vld [vmem:[%s0 + $0x870] sm:$0xff]
      %v473 = vld [vmem:[%s0 + $0x878] sm:$0xff]
      %v474 = vld [vmem:[%s0 + $0x880] sm:$0xff]
      %v475 = vld [vmem:[%s0 + $0x888] sm:$0xff]
      %v476 = vld [vmem:[%s0 + $0x890] sm:$0xff]
      %v477 = vld [vmem:[%s0 + $0x898] sm:$0xff]
      %v478 = vld [vmem:[%s0 + $0x8a0] sm:$0xff]
      %v479 = vld [vmem:[%s0 + $0x8a8] sm:$0xff]
      %v480 = vld [vmem:[%s0 + $0x8b0] sm:$0xff]
      %v481 = vld [vmem:[%s0 + $0x8b8] sm:$0xff]
      %v482 = vld [vmem:[%s0 + $0x8c0] sm:$0xff]
      %v483 = vld [vmem:[%s0 + $0x8c8] sm:$0xff]
      %v484 = vld [vmem:[%s0 + $0x8d0] sm:$0xff]
      %v485 = vld [vmem:[%s0 + $0x8d8] sm:$0xff]
      %v486 = vld [vmem:[%s0 + $0x8e0] sm:$0xff]
      %v487 = vld [vmem:[%s0 + $0x8e8] sm:$0xff]
      %v488 = vld [vmem:[%s0 + $0x8f0] sm:$0xff]
      %v489 = vld [vmem:[%s0 + $0x8f8] sm:$0xff]
      %v490 = vld [vmem:[%s0 + $0x900] sm:$0xf]
      %v491 = vld [vmem:[%s0 + $0x908] sm:$0xf]
      %v492 = vld [vmem:[%s0 + $0x910] sm:$0xf]
      %v493 = vld [vmem:[%s0 + $0x918] sm:$0xf]
      %v494 = vld [vmem:[%s0 + $0x920] sm:$0xf]
      %v495 = vld [vmem:[%s0 + $0x928] sm:$0xf]
      %v496 = vld [vmem:[%s0 + $0x930] sm:$0xf]
      %v497 = vld [vmem:[%s0 + $0x938] sm:$0xf]
      %v498 = vld [vmem:[%s0 + $0x940] sm:$0xf]
      %v499 = vld [vmem:[%s0 + $0x948] sm:$0xf]
      %v500 = vld [vmem:[%s0 + $0x950] sm:$0xf]
      %v501 = vld [vmem:[%s0 + $0x958] sm:$0xf]
      %v502 = vpack.c.bf16 %v214, %v202
      %v503 = vpack.c.bf16 %v215, %v203
      %v504 = vpack.c.bf16 %v216, %v204
      %v505 = vpack.c.bf16 %v217, %v205
      %v506 = vpack.c.bf16 %v218, %v206
      %v507 = vpack.c.bf16 %v219, %v207
      %v508 = vpack.c.bf16 %v220, %v208
      %v509 = vpack.c.bf16 %v221, %v209
      %v510 = vpack.c.bf16 %v222, %v210
      %v511 = vpack.c.bf16 %v223, %v211
      %v512 = vpack.c.bf16 %v224, %v212
      %v513 = vpack.c.bf16 %v225, %v213
      %v514 = vpack.c.bf16 %v238, %v226
      %v515 = vpack.c.bf16 %v239, %v227
      %v516 = vpack.c.bf16 %v240, %v228
      %v517 = vpack.c.bf16 %v241, %v229
      %v518 = vpack.c.bf16 %v242, %v230
      %v519 = vpack.c.bf16 %v243, %v231
      %v520 = vpack.c.bf16 %v244, %v232
      %v521 = vpack.c.bf16 %v245, %v233
      %v522 = vpack.c.bf16 %v246, %v234
      %v523 = vpack.c.bf16 %v247, %v235
      %v524 = vpack.c.bf16 %v248, %v236
      %v525 = vpack.c.bf16 %v249, %v237
      %v526 = vpack.c.bf16 %v262, %v250
      %v527 = vpack.c.bf16 %v263, %v251
      %v528 = vpack.c.bf16 %v264, %v252
      %v529 = vpack.c.bf16 %v265, %v253
      %v530 = vpack.c.bf16 %v266, %v254
      %v531 = vpack.c.bf16 %v267, %v255
      %v532 = vpack.c.bf16 %v268, %v256
      %v533 = vpack.c.bf16 %v269, %v257
      %v534 = vpack.c.bf16 %v270, %v258
      %v535 = vpack.c.bf16 %v271, %v259
      %v536 = vpack.c.bf16 %v272, %v260
      %v537 = vpack.c.bf16 %v273, %v261
      %v538 = vpack.c.bf16 %v286, %v274
      %v539 = vpack.c.bf16 %v287, %v275
      %v540 = vpack.c.bf16 %v288, %v276
      %v541 = vpack.c.bf16 %v289, %v277
      %v542 = vpack.c.bf16 %v290, %v278
      %v543 = vpack.c.bf16 %v291, %v279
      %v544 = vpack.c.bf16 %v292, %v280
      %v545 = vpack.c.bf16 %v293, %v281
      %v546 = vpack.c.bf16 %v294, %v282
      %v547 = vpack.c.bf16 %v295, %v283
      %v548 = vpack.c.bf16 %v296, %v284
      %v549 = vpack.c.bf16 %v297, %v285
      %v550 = vpack.c.bf16 %v310, %v298
      %v551 = vpack.c.bf16 %v311, %v299
      %v552 = vpack.c.bf16 %v312, %v300
      %v553 = vpack.c.bf16 %v313, %v301
      %v554 = vpack.c.bf16 %v314, %v302
      %v555 = vpack.c.bf16 %v315, %v303
      %v556 = vpack.c.bf16 %v316, %v304
      %v557 = vpack.c.bf16 %v317, %v305
      %v558 = vpack.c.bf16 %v318, %v306
      %v559 = vpack.c.bf16 %v319, %v307
      %v560 = vpack.c.bf16 %v320, %v308
      %v561 = vpack.c.bf16 %v321, %v309
      %v562 = vpack.c.bf16 %v334, %v322
      %v563 = vpack.c.bf16 %v335, %v323
      %v564 = vpack.c.bf16 %v336, %v324
      %v565 = vpack.c.bf16 %v337, %v325
      %v566 = vpack.c.bf16 %v338, %v326
      %v567 = vpack.c.bf16 %v339, %v327
      %v568 = vpack.c.bf16 %v340, %v328
      %v569 = vpack.c.bf16 %v341, %v329
      %v570 = vpack.c.bf16 %v342, %v330
      %v571 = vpack.c.bf16 %v343, %v331
      %v572 = vpack.c.bf16 %v344, %v332
      %v573 = vpack.c.bf16 %v345, %v333
      %v574 = vpack.c.bf16 %v358, %v346
      %v575 = vpack.c.bf16 %v359, %v347
      %v576 = vpack.c.bf16 %v360, %v348
      %v577 = vpack.c.bf16 %v361, %v349
      %v578 = vpack.c.bf16 %v362, %v350
      %v579 = vpack.c.bf16 %v363, %v351
      %v580 = vpack.c.bf16 %v364, %v352
      %v581 = vpack.c.bf16 %v365, %v353
      %v582 = vpack.c.bf16 %v366, %v354
      %v583 = vpack.c.bf16 %v367, %v355
      %v584 = vpack.c.bf16 %v368, %v356
      %v585 = vpack.c.bf16 %v369, %v357
      %v586 = vpack.c.bf16 %v382, %v370
      %v587 = vpack.c.bf16 %v383, %v371
      %v588 = vpack.c.bf16 %v384, %v372
      %v589 = vpack.c.bf16 %v385, %v373
      %v590 = vpack.c.bf16 %v386, %v374
      %v591 = vpack.c.bf16 %v387, %v375
      %v592 = vpack.c.bf16 %v388, %v376
      %v593 = vpack.c.bf16 %v389, %v377
      %v594 = vpack.c.bf16 %v390, %v378
      %v595 = vpack.c.bf16 %v391, %v379
      %v596 = vpack.c.bf16 %v392, %v380
      %v597 = vpack.c.bf16 %v393, %v381
      %v598 = vpack.c.bf16 %v406, %v394
      %v599 = vpack.c.bf16 %v407, %v395
      %v600 = vpack.c.bf16 %v408, %v396
      %v601 = vpack.c.bf16 %v409, %v397
      %v602 = vpack.c.bf16 %v410, %v398
      %v603 = vpack.c.bf16 %v411, %v399
      %v604 = vpack.c.bf16 %v412, %v400
      %v605 = vpack.c.bf16 %v413, %v401
      %v606 = vpack.c.bf16 %v414, %v402
      %v607 = vpack.c.bf16 %v415, %v403
      %v608 = vpack.c.bf16 %v416, %v404
      %v609 = vpack.c.bf16 %v417, %v405
      %v610 = vpack.c.bf16 %v430, %v418
      %v611 = vpack.c.bf16 %v431, %v419
      %v612 = vpack.c.bf16 %v432, %v420
      %v613 = vpack.c.bf16 %v433, %v421
      %v614 = vpack.c.bf16 %v434, %v422
      %v615 = vpack.c.bf16 %v435, %v423
      %v616 = vpack.c.bf16 %v436, %v424
      %v617 = vpack.c.bf16 %v437, %v425
      %v618 = vpack.c.bf16 %v438, %v426
      %v619 = vpack.c.bf16 %v439, %v427
      %v620 = vpack.c.bf16 %v440, %v428
      %v621 = vpack.c.bf16 %v441, %v429
      %v622 = vpack.c.bf16 %v454, %v442
      %v623 = vpack.c.bf16 %v455, %v443
      %v624 = vpack.c.bf16 %v456, %v444
      %v625 = vpack.c.bf16 %v457, %v445
      %v626 = vpack.c.bf16 %v458, %v446
      %v627 = vpack.c.bf16 %v459, %v447
      %v628 = vpack.c.bf16 %v460, %v448
      %v629 = vpack.c.bf16 %v461, %v449
      %v630 = vpack.c.bf16 %v462, %v450
      %v631 = vpack.c.bf16 %v463, %v451
      %v632 = vpack.c.bf16 %v464, %v452
      %v633 = vpack.c.bf16 %v465, %v453
      %v634 = vpack.c.bf16 %v478, %v466
      %v635 = vpack.c.bf16 %v479, %v467
      %v636 = vpack.c.bf16 %v480, %v468
      %v637 = vpack.c.bf16 %v481, %v469
      %v638 = vpack.c.bf16 %v482, %v470
      %v639 = vpack.c.bf16 %v483, %v471
      %v640 = vpack.c.bf16 %v484, %v472
      %v641 = vpack.c.bf16 %v485, %v473
      %v642 = vpack.c.bf16 %v486, %v474
      %v643 = vpack.c.bf16 %v487, %v475
      %v644 = vpack.c.bf16 %v488, %v476
      %v645 = vpack.c.bf16 %v489, %v477
      %v646 = vpack.c.bf16 %v490, %v490
      %v647 = vpack.c.bf16 %v491, %v491
      %v648 = vpack.c.bf16 %v492, %v492
      %v649 = vpack.c.bf16 %v493, %v493
      %v650 = vpack.c.bf16 %v494, %v494
      %v651 = vpack.c.bf16 %v495, %v495
      %v652 = vpack.c.bf16 %v496, %v496
      %v653 = vpack.c.bf16 %v497, %v497
      %v654 = vpack.c.bf16 %v498, %v498
      %v655 = vpack.c.bf16 %v499, %v499
      %v656 = vpack.c.bf16 %v500, %v500
      %v657 = vpack.c.bf16 %v501, %v501
      %v658 = vld [vmem:[%s186] sm:$0xff]
      %v659 = vld [vmem:[%s186 + $0x8] sm:$0xff]
      %v660 = vld [vmem:[%s186 + $0x10] sm:$0xff]
      %v661 = vld [vmem:[%s186 + $0x18] sm:$0xff]
      %v662 = vld [vmem:[%s186 + $0x20] sm:$0xff]
      %v663 = vld [vmem:[%s186 + $0x28] sm:$0xff]
      %v664 = vld [vmem:[%s186 + $0x30] sm:$0xff]
      %v665 = vld [vmem:[%s186 + $0x38] sm:$0xff]
      %v666 = vld [vmem:[%s186 + $0x40] sm:$0xff]
      %v667 = vld [vmem:[%s186 + $0x48] sm:$0xff]
      %v668 = vld [vmem:[%s186 + $0x50] sm:$0xff]
      %v669 = vld [vmem:[%s186 + $0x58] sm:$0xff]
      %v670 = vld [vmem:[%s186 + $0x60] sm:$0xff]
      %v671 = vld [vmem:[%s186 + $0x68] sm:$0xff]
      %v672 = vld [vmem:[%s186 + $0x70] sm:$0xff]
      %v673 = vld [vmem:[%s186 + $0x78] sm:$0xff]
      %v674 = vld [vmem:[%s186 + $0x80] sm:$0xff]
      %v675 = vld [vmem:[%s186 + $0x88] sm:$0xff]
      %v676 = vld [vmem:[%s186 + $0x90] sm:$0xff]
      %v677 = vld [vmem:[%s186 + $0x98] sm:$0xff]
      %v678 = vld [vmem:[%s186 + $0xa0] sm:$0xff]
      %v679 = vld [vmem:[%s186 + $0xa8] sm:$0xff]
      %v680 = vld [vmem:[%s186 + $0xb0] sm:$0xff]
      %v681 = vld [vmem:[%s186 + $0xb8] sm:$0xff]
      %v682 = vld [vmem:[%s186 + $0xc0] sm:$0xff]
      %v683 = vld [vmem:[%s186 + $0xc8] sm:$0xff]
      %v684 = vld [vmem:[%s186 + $0xd0] sm:$0xff]
      %v685 = vld [vmem:[%s186 + $0xd8] sm:$0xff]
      %v686 = vld [vmem:[%s186 + $0xe0] sm:$0xff]
      %v687 = vld [vmem:[%s186 + $0xe8] sm:$0xff]
      %v688 = vld [vmem:[%s186 + $0xf0] sm:$0xff]
      %v689 = vld [vmem:[%s186 + $0xf8] sm:$0xff]
      %v690 = vld [vmem:[%s186 + $0x100] sm:$0xff]
      %v691 = vld [vmem:[%s186 + $0x108] sm:$0xff]
      %v692 = vld [vmem:[%s186 + $0x110] sm:$0xff]
      %v693 = vld [vmem:[%s186 + $0x118] sm:$0xff]
      %v694 = vld [vmem:[%s186 + $0x120] sm:$0xff]
      %v695 = vld [vmem:[%s186 + $0x128] sm:$0xff]
      %v696 = vld [vmem:[%s186 + $0x130] sm:$0xff]
      %v697 = vld [vmem:[%s186 + $0x138] sm:$0xff]
      %v698 = vld [vmem:[%s186 + $0x140] sm:$0xff]
      %v699 = vld [vmem:[%s186 + $0x148] sm:$0xff]
      %v700 = vld [vmem:[%s186 + $0x150] sm:$0xff]
      %v701 = vld [vmem:[%s186 + $0x158] sm:$0xff]
      %v702 = vld [vmem:[%s186 + $0x160] sm:$0xff]
      %v703 = vld [vmem:[%s186 + $0x168] sm:$0xff]
      %v704 = vld [vmem:[%s186 + $0x170] sm:$0xff]
      %v705 = vld [vmem:[%s186 + $0x178] sm:$0xff]
      %v706 = vld [vmem:[%s186 + $0x180] sm:$0xff]
      %v707 = vld [vmem:[%s186 + $0x188] sm:$0xff]
      %v708 = vld [vmem:[%s186 + $0x190] sm:$0xff]
      %v709 = vld [vmem:[%s186 + $0x198] sm:$0xff]
      %v710 = vld [vmem:[%s186 + $0x1a0] sm:$0xff]
      %v711 = vld [vmem:[%s186 + $0x1a8] sm:$0xff]
      %v712 = vld [vmem:[%s186 + $0x1b0] sm:$0xff]
      %v713 = vld [vmem:[%s186 + $0x1b8] sm:$0xff]
      %v714 = vld [vmem:[%s186 + $0x1c0] sm:$0xff]
      %v715 = vld [vmem:[%s186 + $0x1c8] sm:$0xff]
      %v716 = vld [vmem:[%s186 + $0x1d0] sm:$0xff]
      %v717 = vld [vmem:[%s186 + $0x1d8] sm:$0xff]
      %v718 = vld [vmem:[%s186 + $0x1e0] sm:$0xff]
      %v719 = vld [vmem:[%s186 + $0x1e8] sm:$0xff]
      %v720 = vld [vmem:[%s186 + $0x1f0] sm:$0xff]
      %v721 = vld [vmem:[%s186 + $0x1f8] sm:$0xff]
      %v722 = vld [vmem:[%s186 + $0x200] sm:$0xff]
      %v723 = vld [vmem:[%s186 + $0x208] sm:$0xff]
      %v724 = vld [vmem:[%s186 + $0x210] sm:$0xff]
      %v725 = vld [vmem:[%s186 + $0x218] sm:$0xff]
      %v726 = vld [vmem:[%s186 + $0x220] sm:$0xff]
      %v727 = vld [vmem:[%s186 + $0x228] sm:$0xff]
      %v728 = vld [vmem:[%s186 + $0x230] sm:$0xff]
      %v729 = vld [vmem:[%s186 + $0x238] sm:$0xff]
      %v730 = vld [vmem:[%s186 + $0x240] sm:$0xff]
      %v731 = vld [vmem:[%s186 + $0x248] sm:$0xff]
      %v732 = vld [vmem:[%s186 + $0x250] sm:$0xff]
      %v733 = vld [vmem:[%s186 + $0x258] sm:$0xff]
      %v734 = vld [vmem:[%s186 + $0x260] sm:$0xff]
      %v735 = vld [vmem:[%s186 + $0x268] sm:$0xff]
      %v736 = vld [vmem:[%s186 + $0x270] sm:$0xff]
      %v737 = vld [vmem:[%s186 + $0x278] sm:$0xff]
      %v738 = vld [vmem:[%s186 + $0x280] sm:$0xff]
      %v739 = vld [vmem:[%s186 + $0x288] sm:$0xff]
      %v740 = vld [vmem:[%s186 + $0x290] sm:$0xff]
      %v741 = vld [vmem:[%s186 + $0x298] sm:$0xff]
      %v742 = vld [vmem:[%s186 + $0x2a0] sm:$0xff]
      %v743 = vld [vmem:[%s186 + $0x2a8] sm:$0xff]
      %v744 = vld [vmem:[%s186 + $0x2b0] sm:$0xff]
      %v745 = vld [vmem:[%s186 + $0x2b8] sm:$0xff]
      %v746 = vld [vmem:[%s186 + $0x2c0] sm:$0xff]
      %v747 = vld [vmem:[%s186 + $0x2c8] sm:$0xff]
      %v748 = vld [vmem:[%s186 + $0x2d0] sm:$0xff]
      %v749 = vld [vmem:[%s186 + $0x2d8] sm:$0xff]
      %v750 = vld [vmem:[%s186 + $0x2e0] sm:$0xff]
      %v751 = vld [vmem:[%s186 + $0x2e8] sm:$0xff]
      %v752 = vld [vmem:[%s186 + $0x2f0] sm:$0xff]
      %v753 = vld [vmem:[%s186 + $0x2f8] sm:$0xff]
      %v754 = vld [vmem:[%s186 + $0x300] sm:$0xff]
      %v755 = vld [vmem:[%s186 + $0x308] sm:$0xff]
      %v756 = vld [vmem:[%s186 + $0x310] sm:$0xff]
      %v757 = vld [vmem:[%s186 + $0x318] sm:$0xff]
      %v758 = vld [vmem:[%s186 + $0x320] sm:$0xff]
      %v759 = vld [vmem:[%s186 + $0x328] sm:$0xff]
      %v760 = vld [vmem:[%s186 + $0x330] sm:$0xff]
      %v761 = vld [vmem:[%s186 + $0x338] sm:$0xff]
      %v762 = vld [vmem:[%s186 + $0x340] sm:$0xff]
      %v763 = vld [vmem:[%s186 + $0x348] sm:$0xff]
      %v764 = vld [vmem:[%s186 + $0x350] sm:$0xff]
      %v765 = vld [vmem:[%s186 + $0x358] sm:$0xff]
      %v766 = vld [vmem:[%s186 + $0x360] sm:$0xff]
      %v767 = vld [vmem:[%s186 + $0x368] sm:$0xff]
      %v768 = vld [vmem:[%s186 + $0x370] sm:$0xff]
      %v769 = vld [vmem:[%s186 + $0x378] sm:$0xff]
      %v770 = vld [vmem:[%s186 + $0x380] sm:$0xff]
      %v771 = vld [vmem:[%s186 + $0x388] sm:$0xff]
      %v772 = vld [vmem:[%s186 + $0x390] sm:$0xff]
      %v773 = vld [vmem:[%s186 + $0x398] sm:$0xff]
      %v774 = vld [vmem:[%s186 + $0x3a0] sm:$0xff]
      %v775 = vld [vmem:[%s186 + $0x3a8] sm:$0xff]
      %v776 = vld [vmem:[%s186 + $0x3b0] sm:$0xff]
      %v777 = vld [vmem:[%s186 + $0x3b8] sm:$0xff]
      %v778 = vld [vmem:[%s186 + $0x3c0] sm:$0xff]
      %v779 = vld [vmem:[%s186 + $0x3c8] sm:$0xff]
      %v780 = vld [vmem:[%s186 + $0x3d0] sm:$0xff]
      %v781 = vld [vmem:[%s186 + $0x3d8] sm:$0xff]
      %v782 = vld [vmem:[%s186 + $0x3e0] sm:$0xff]
      %v783 = vld [vmem:[%s186 + $0x3e8] sm:$0xff]
      %v784 = vld [vmem:[%s186 + $0x3f0] sm:$0xff]
      %v785 = vld [vmem:[%s186 + $0x3f8] sm:$0xff]
      %v786 = vld [vmem:[%s186 + $0x400] sm:$0xff]
      %v787 = vld [vmem:[%s186 + $0x408] sm:$0xff]
      %v788 = vld [vmem:[%s186 + $0x410] sm:$0xff]
      %v789 = vld [vmem:[%s186 + $0x418] sm:$0xff]
      %v790 = vld [vmem:[%s186 + $0x420] sm:$0xff]
      %v791 = vld [vmem:[%s186 + $0x428] sm:$0xff]
      %v792 = vld [vmem:[%s186 + $0x430] sm:$0xff]
      %v793 = vld [vmem:[%s186 + $0x438] sm:$0xff]
      %v794 = vld [vmem:[%s186 + $0x440] sm:$0xff]
      %v795 = vld [vmem:[%s186 + $0x448] sm:$0xff]
      %v796 = vld [vmem:[%s186 + $0x450] sm:$0xff]
      %v797 = vld [vmem:[%s186 + $0x458] sm:$0xff]
      %v798 = vld [vmem:[%s186 + $0x460] sm:$0xff]
      %v799 = vld [vmem:[%s186 + $0x468] sm:$0xff]
      %v800 = vld [vmem:[%s186 + $0x470] sm:$0xff]
      %v801 = vld [vmem:[%s186 + $0x478] sm:$0xff]
      %v802 = vld [vmem:[%s192] sm:$0xff]
      %v803 = vld [vmem:[%s192 + $0x8] sm:$0xff]
      %v804 = vld [vmem:[%s192 + $0x10] sm:$0xff]
      %v805 = vld [vmem:[%s192 + $0x18] sm:$0xff]
      %v806 = vld [vmem:[%s192 + $0x20] sm:$0xff]
      %v807 = vld [vmem:[%s192 + $0x28] sm:$0xff]
      %v808 = vld [vmem:[%s192 + $0x30] sm:$0xff]
      %v809 = vld [vmem:[%s192 + $0x38] sm:$0xff]
      %v810 = vld [vmem:[%s192 + $0x40] sm:$0xff]
      %v811 = vld [vmem:[%s192 + $0x48] sm:$0xff]
      %v812 = vld [vmem:[%s192 + $0x50] sm:$0xff]
      %v813 = vld [vmem:[%s192 + $0x58] sm:$0xff]
      %v814 = vld [vmem:[%s192 + $0x60] sm:$0xff]
      %v815 = vld [vmem:[%s192 + $0x68] sm:$0xff]
      %v816 = vld [vmem:[%s192 + $0x70] sm:$0xff]
      %v817 = vld [vmem:[%s192 + $0x78] sm:$0xff]
      %v818 = vld [vmem:[%s192 + $0x80] sm:$0xff]
      %v819 = vld [vmem:[%s192 + $0x88] sm:$0xff]
      %v820 = vld [vmem:[%s192 + $0x90] sm:$0xff]
      %v821 = vld [vmem:[%s192 + $0x98] sm:$0xff]
      %v822 = vld [vmem:[%s192 + $0xa0] sm:$0xff]
      %v823 = vld [vmem:[%s192 + $0xa8] sm:$0xff]
      %v824 = vld [vmem:[%s192 + $0xb0] sm:$0xff]
      %v825 = vld [vmem:[%s192 + $0xb8] sm:$0xff]
      %827 = vset.pattern.permute.xlu0 0
      %828 = vperm.xlu0 %827, %v802
      %v829 = vpop.permute.xlu0 %828
      %832 = vset.pattern.permute.xlu0 0
      %833 = vperm.xlu0 %832, %v803
      %v834 = vpop.permute.xlu0 %833
      %837 = vset.pattern.permute.xlu0 0
      %838 = vperm.xlu0 %837, %v804
      %v839 = vpop.permute.xlu0 %838
      %842 = vset.pattern.permute.xlu0 0
      %843 = vperm.xlu0 %842, %v805
      %v844 = vpop.permute.xlu0 %843
      %847 = vset.pattern.permute.xlu0 0
      %848 = vperm.xlu0 %847, %v806
      %v849 = vpop.permute.xlu0 %848
      %852 = vset.pattern.permute.xlu0 0
      %853 = vperm.xlu0 %852, %v807
      %v854 = vpop.permute.xlu0 %853
      %857 = vset.pattern.permute.xlu0 0
      %858 = vperm.xlu0 %857, %v808
      %v859 = vpop.permute.xlu0 %858
      %862 = vset.pattern.permute.xlu0 0
      %863 = vperm.xlu0 %862, %v809
      %v864 = vpop.permute.xlu0 %863
      %867 = vset.pattern.permute.xlu0 0
      %868 = vperm.xlu0 %867, %v810
      %v869 = vpop.permute.xlu0 %868
      %872 = vset.pattern.permute.xlu0 0
      %873 = vperm.xlu0 %872, %v811
      %v874 = vpop.permute.xlu0 %873
      %877 = vset.pattern.permute.xlu0 0
      %878 = vperm.xlu0 %877, %v812
      %v879 = vpop.permute.xlu0 %878
      %882 = vset.pattern.permute.xlu0 0
      %883 = vperm.xlu0 %882, %v813
      %v884 = vpop.permute.xlu0 %883
      %887 = vset.pattern.permute.xlu0 0
      %888 = vperm.xlu0 %887, %v814
      %v889 = vpop.permute.xlu0 %888
      %892 = vset.pattern.permute.xlu0 0
      %893 = vperm.xlu0 %892, %v815
      %v894 = vpop.permute.xlu0 %893
      %897 = vset.pattern.permute.xlu0 0
      %898 = vperm.xlu0 %897, %v816
      %v899 = vpop.permute.xlu0 %898
      %902 = vset.pattern.permute.xlu0 0
      %903 = vperm.xlu0 %902, %v817
      %v904 = vpop.permute.xlu0 %903
      %907 = vset.pattern.permute.xlu0 0
      %908 = vperm.xlu0 %907, %v818
      %v909 = vpop.permute.xlu0 %908
      %912 = vset.pattern.permute.xlu0 0
      %913 = vperm.xlu0 %912, %v819
      %v914 = vpop.permute.xlu0 %913
      %917 = vset.pattern.permute.xlu0 0
      %918 = vperm.xlu0 %917, %v820
      %v919 = vpop.permute.xlu0 %918
      %922 = vset.pattern.permute.xlu0 0
      %923 = vperm.xlu0 %922, %v821
      %v924 = vpop.permute.xlu0 %923
      %927 = vset.pattern.permute.xlu0 0
      %928 = vperm.xlu0 %927, %v822
      %v929 = vpop.permute.xlu0 %928
      %932 = vset.pattern.permute.xlu0 0
      %933 = vperm.xlu0 %932, %v823
      %v934 = vpop.permute.xlu0 %933
      %937 = vset.pattern.permute.xlu0 0
      %938 = vperm.xlu0 %937, %v824
      %v939 = vpop.permute.xlu0 %938
      %942 = vset.pattern.permute.xlu0 0
      %943 = vperm.xlu0 %942, %v825
      %v944 = vpop.permute.xlu0 %943
      %v1090 = vunpack.c.l.b16 %v658
      %v1091 = vunpack.c.h.b16 %v658
      %v1092 = vunpack.c.l.b16 %v659
      %v1093 = vunpack.c.h.b16 %v659
      %v1094 = vunpack.c.l.b16 %v660
      %v1095 = vunpack.c.h.b16 %v660
      %v1096 = vunpack.c.l.b16 %v661
      %v1097 = vunpack.c.h.b16 %v661
      %v1098 = vunpack.c.l.b16 %v662
      %v1099 = vunpack.c.h.b16 %v662
      %v1100 = vunpack.c.l.b16 %v663
      %v1101 = vunpack.c.h.b16 %v663
      %v1102 = vunpack.c.l.b16 %v664
      %v1103 = vunpack.c.h.b16 %v664
      %v1104 = vunpack.c.l.b16 %v665
      %v1105 = vunpack.c.h.b16 %v665
      %v1106 = vunpack.c.l.b16 %v666
      %v1107 = vunpack.c.h.b16 %v666
      %v1108 = vunpack.c.l.b16 %v667
      %v1109 = vunpack.c.h.b16 %v667
      %v1110 = vunpack.c.l.b16 %v668
      %v1111 = vunpack.c.h.b16 %v668
      %v1112 = vunpack.c.l.b16 %v669
      %v1113 = vunpack.c.h.b16 %v669
      %v1114 = vunpack.c.l.b16 %v670
      %v1115 = vunpack.c.h.b16 %v670
      %v1116 = vunpack.c.l.b16 %v671
      %v1117 = vunpack.c.h.b16 %v671
      %v1118 = vunpack.c.l.b16 %v672
      %v1119 = vunpack.c.h.b16 %v672
      %v1120 = vunpack.c.l.b16 %v673
      %v1121 = vunpack.c.h.b16 %v673
      %v1122 = vunpack.c.l.b16 %v674
      %v1123 = vunpack.c.h.b16 %v674
      %v1124 = vunpack.c.l.b16 %v675
      %v1125 = vunpack.c.h.b16 %v675
      %v1126 = vunpack.c.l.b16 %v676
      %v1127 = vunpack.c.h.b16 %v676
      %v1128 = vunpack.c.l.b16 %v677
      %v1129 = vunpack.c.h.b16 %v677
      %v1130 = vunpack.c.l.b16 %v678
      %v1131 = vunpack.c.h.b16 %v678
      %v1132 = vunpack.c.l.b16 %v679
      %v1133 = vunpack.c.h.b16 %v679
      %v1134 = vunpack.c.l.b16 %v680
      %v1135 = vunpack.c.h.b16 %v680
      %v1136 = vunpack.c.l.b16 %v681
      %v1137 = vunpack.c.h.b16 %v681
      %v1138 = vunpack.c.l.b16 %v682
      %v1139 = vunpack.c.h.b16 %v682
      %v1140 = vunpack.c.l.b16 %v683
      %v1141 = vunpack.c.h.b16 %v683
      %v1142 = vunpack.c.l.b16 %v684
      %v1143 = vunpack.c.h.b16 %v684
      %v1144 = vunpack.c.l.b16 %v685
      %v1145 = vunpack.c.h.b16 %v685
      %v1146 = vunpack.c.l.b16 %v686
      %v1147 = vunpack.c.h.b16 %v686
      %v1148 = vunpack.c.l.b16 %v687
      %v1149 = vunpack.c.h.b16 %v687
      %v1150 = vunpack.c.l.b16 %v688
      %v1151 = vunpack.c.h.b16 %v688
      %v1152 = vunpack.c.l.b16 %v689
      %v1153 = vunpack.c.h.b16 %v689
      %v1154 = vunpack.c.l.b16 %v690
      %v1155 = vunpack.c.h.b16 %v690
      %v1156 = vunpack.c.l.b16 %v691
      %v1157 = vunpack.c.h.b16 %v691
      %v1158 = vunpack.c.l.b16 %v692
      %v1159 = vunpack.c.h.b16 %v692
      %v1160 = vunpack.c.l.b16 %v693
      %v1161 = vunpack.c.h.b16 %v693
      %v1162 = vunpack.c.l.b16 %v694
      %v1163 = vunpack.c.h.b16 %v694
      %v1164 = vunpack.c.l.b16 %v695
      %v1165 = vunpack.c.h.b16 %v695
      %v1166 = vunpack.c.l.b16 %v696
      %v1167 = vunpack.c.h.b16 %v696
      %v1168 = vunpack.c.l.b16 %v697
      %v1169 = vunpack.c.h.b16 %v697
      %v1170 = vunpack.c.l.b16 %v698
      %v1171 = vunpack.c.h.b16 %v698
      %v1172 = vunpack.c.l.b16 %v699
      %v1173 = vunpack.c.h.b16 %v699
      %v1174 = vunpack.c.l.b16 %v700
      %v1175 = vunpack.c.h.b16 %v700
      %v1176 = vunpack.c.l.b16 %v701
      %v1177 = vunpack.c.h.b16 %v701
      %v1178 = vunpack.c.l.b16 %v702
      %v1179 = vunpack.c.h.b16 %v702
      %v1180 = vunpack.c.l.b16 %v703
      %v1181 = vunpack.c.h.b16 %v703
      %v1182 = vunpack.c.l.b16 %v704
      %v1183 = vunpack.c.h.b16 %v704
      %v1184 = vunpack.c.l.b16 %v705
      %v1185 = vunpack.c.h.b16 %v705
      %v1186 = vunpack.c.l.b16 %v706
      %v1187 = vunpack.c.h.b16 %v706
      %v1188 = vunpack.c.l.b16 %v707
      %v1189 = vunpack.c.h.b16 %v707
      %v1190 = vunpack.c.l.b16 %v708
      %v1191 = vunpack.c.h.b16 %v708
      %v1192 = vunpack.c.l.b16 %v709
      %v1193 = vunpack.c.h.b16 %v709
      %v1194 = vunpack.c.l.b16 %v710
      %v1195 = vunpack.c.h.b16 %v710
      %v1196 = vunpack.c.l.b16 %v711
      %v1197 = vunpack.c.h.b16 %v711
      %v1198 = vunpack.c.l.b16 %v712
      %v1199 = vunpack.c.h.b16 %v712
      %v1200 = vunpack.c.l.b16 %v713
      %v1201 = vunpack.c.h.b16 %v713
      %v1202 = vunpack.c.l.b16 %v714
      %v1203 = vunpack.c.h.b16 %v714
      %v1204 = vunpack.c.l.b16 %v715
      %v1205 = vunpack.c.h.b16 %v715
      %v1206 = vunpack.c.l.b16 %v716
      %v1207 = vunpack.c.h.b16 %v716
      %v1208 = vunpack.c.l.b16 %v717
      %v1209 = vunpack.c.h.b16 %v717
      %v1210 = vunpack.c.l.b16 %v718
      %v1211 = vunpack.c.h.b16 %v718
      %v1212 = vunpack.c.l.b16 %v719
      %v1213 = vunpack.c.h.b16 %v719
      %v1214 = vunpack.c.l.b16 %v720
      %v1215 = vunpack.c.h.b16 %v720
      %v1216 = vunpack.c.l.b16 %v721
      %v1217 = vunpack.c.h.b16 %v721
      %v1218 = vunpack.c.l.b16 %v722
      %v1219 = vunpack.c.h.b16 %v722
      %v1220 = vunpack.c.l.b16 %v723
      %v1221 = vunpack.c.h.b16 %v723
      %v1222 = vunpack.c.l.b16 %v724
      %v1223 = vunpack.c.h.b16 %v724
      %v1224 = vunpack.c.l.b16 %v725
      %v1225 = vunpack.c.h.b16 %v725
      %v1226 = vunpack.c.l.b16 %v726
      %v1227 = vunpack.c.h.b16 %v726
      %v1228 = vunpack.c.l.b16 %v727
      %v1229 = vunpack.c.h.b16 %v727
      %v1230 = vunpack.c.l.b16 %v728
      %v1231 = vunpack.c.h.b16 %v728
      %v1232 = vunpack.c.l.b16 %v729
      %v1233 = vunpack.c.h.b16 %v729
      %v1234 = vunpack.c.l.b16 %v730
      %v1235 = vunpack.c.h.b16 %v730
      %v1236 = vunpack.c.l.b16 %v731
      %v1237 = vunpack.c.h.b16 %v731
      %v1238 = vunpack.c.l.b16 %v732
      %v1239 = vunpack.c.h.b16 %v732
      %v1240 = vunpack.c.l.b16 %v733
      %v1241 = vunpack.c.h.b16 %v733
      %v1242 = vunpack.c.l.b16 %v734
      %v1243 = vunpack.c.h.b16 %v734
      %v1244 = vunpack.c.l.b16 %v735
      %v1245 = vunpack.c.h.b16 %v735
      %v1246 = vunpack.c.l.b16 %v736
      %v1247 = vunpack.c.h.b16 %v736
      %v1248 = vunpack.c.l.b16 %v737
      %v1249 = vunpack.c.h.b16 %v737
      %v1250 = vunpack.c.l.b16 %v738
      %v1251 = vunpack.c.h.b16 %v738
      %v1252 = vunpack.c.l.b16 %v739
      %v1253 = vunpack.c.h.b16 %v739
      %v1254 = vunpack.c.l.b16 %v740
      %v1255 = vunpack.c.h.b16 %v740
      %v1256 = vunpack.c.l.b16 %v741
      %v1257 = vunpack.c.h.b16 %v741
      %v1258 = vunpack.c.l.b16 %v742
      %v1259 = vunpack.c.h.b16 %v742
      %v1260 = vunpack.c.l.b16 %v743
      %v1261 = vunpack.c.h.b16 %v743
      %v1262 = vunpack.c.l.b16 %v744
      %v1263 = vunpack.c.h.b16 %v744
      %v1264 = vunpack.c.l.b16 %v745
      %v1265 = vunpack.c.h.b16 %v745
      %v1266 = vunpack.c.l.b16 %v746
      %v1267 = vunpack.c.h.b16 %v746
      %v1268 = vunpack.c.l.b16 %v747
      %v1269 = vunpack.c.h.b16 %v747
      %v1270 = vunpack.c.l.b16 %v748
      %v1271 = vunpack.c.h.b16 %v748
      %v1272 = vunpack.c.l.b16 %v749
      %v1273 = vunpack.c.h.b16 %v749
      %v1274 = vunpack.c.l.b16 %v750
      %v1275 = vunpack.c.h.b16 %v750
      %v1276 = vunpack.c.l.b16 %v751
      %v1277 = vunpack.c.h.b16 %v751
      %v1278 = vunpack.c.l.b16 %v752
      %v1279 = vunpack.c.h.b16 %v752
      %v1280 = vunpack.c.l.b16 %v753
      %v1281 = vunpack.c.h.b16 %v753
      %v1282 = vunpack.c.l.b16 %v754
      %v1283 = vunpack.c.h.b16 %v754
      %v1284 = vunpack.c.l.b16 %v755
      %v1285 = vunpack.c.h.b16 %v755
      %v1286 = vunpack.c.l.b16 %v756
      %v1287 = vunpack.c.h.b16 %v756
      %v1288 = vunpack.c.l.b16 %v757
      %v1289 = vunpack.c.h.b16 %v757
      %v1290 = vunpack.c.l.b16 %v758
      %v1291 = vunpack.c.h.b16 %v758
      %v1292 = vunpack.c.l.b16 %v759
      %v1293 = vunpack.c.h.b16 %v759
      %v1294 = vunpack.c.l.b16 %v760
      %v1295 = vunpack.c.h.b16 %v760
      %v1296 = vunpack.c.l.b16 %v761
      %v1297 = vunpack.c.h.b16 %v761
      %v1298 = vunpack.c.l.b16 %v762
      %v1299 = vunpack.c.h.b16 %v762
      %v1300 = vunpack.c.l.b16 %v763
      %v1301 = vunpack.c.h.b16 %v763
      %v1302 = vunpack.c.l.b16 %v764
      %v1303 = vunpack.c.h.b16 %v764
      %v1304 = vunpack.c.l.b16 %v765
      %v1305 = vunpack.c.h.b16 %v765
      %v1306 = vunpack.c.l.b16 %v766
      %v1307 = vunpack.c.h.b16 %v766
      %v1308 = vunpack.c.l.b16 %v767
      %v1309 = vunpack.c.h.b16 %v767
      %v1310 = vunpack.c.l.b16 %v768
      %v1311 = vunpack.c.h.b16 %v768
      %v1312 = vunpack.c.l.b16 %v769
      %v1313 = vunpack.c.h.b16 %v769
      %v1314 = vunpack.c.l.b16 %v770
      %v1315 = vunpack.c.h.b16 %v770
      %v1316 = vunpack.c.l.b16 %v771
      %v1317 = vunpack.c.h.b16 %v771
      %v1318 = vunpack.c.l.b16 %v772
      %v1319 = vunpack.c.h.b16 %v772
      %v1320 = vunpack.c.l.b16 %v773
      %v1321 = vunpack.c.h.b16 %v773
      %v1322 = vunpack.c.l.b16 %v774
      %v1323 = vunpack.c.h.b16 %v774
      %v1324 = vunpack.c.l.b16 %v775
      %v1325 = vunpack.c.h.b16 %v775
      %v1326 = vunpack.c.l.b16 %v776
      %v1327 = vunpack.c.h.b16 %v776
      %v1328 = vunpack.c.l.b16 %v777
      %v1329 = vunpack.c.h.b16 %v777
      %v1330 = vunpack.c.l.b16 %v778
      %v1331 = vunpack.c.h.b16 %v778
      %v1332 = vunpack.c.l.b16 %v779
      %v1333 = vunpack.c.h.b16 %v779
      %v1334 = vunpack.c.l.b16 %v780
      %v1335 = vunpack.c.h.b16 %v780
      %v1336 = vunpack.c.l.b16 %v781
      %v1337 = vunpack.c.h.b16 %v781
      %v1338 = vunpack.c.l.b16 %v782
      %v1339 = vunpack.c.h.b16 %v782
      %v1340 = vunpack.c.l.b16 %v783
      %v1341 = vunpack.c.h.b16 %v783
      %v1342 = vunpack.c.l.b16 %v784
      %v1343 = vunpack.c.h.b16 %v784
      %v1344 = vunpack.c.l.b16 %v785
      %v1345 = vunpack.c.h.b16 %v785
      %v1346 = vunpack.c.l.b16 %v786
      %v1347 = vunpack.c.h.b16 %v786
      %v1348 = vunpack.c.l.b16 %v787
      %v1349 = vunpack.c.h.b16 %v787
      %v1350 = vunpack.c.l.b16 %v788
      %v1351 = vunpack.c.h.b16 %v788
      %v1352 = vunpack.c.l.b16 %v789
      %v1353 = vunpack.c.h.b16 %v789
      %v1354 = vunpack.c.l.b16 %v790
      %v1355 = vunpack.c.h.b16 %v790
      %v1356 = vunpack.c.l.b16 %v791
      %v1357 = vunpack.c.h.b16 %v791
      %v1358 = vunpack.c.l.b16 %v792
      %v1359 = vunpack.c.h.b16 %v792
      %v1360 = vunpack.c.l.b16 %v793
      %v1361 = vunpack.c.h.b16 %v793
      %v1362 = vunpack.c.l.b16 %v794
      %v1363 = vunpack.c.h.b16 %v794
      %v1364 = vunpack.c.l.b16 %v795
      %v1365 = vunpack.c.h.b16 %v795
      %v1366 = vunpack.c.l.b16 %v796
      %v1367 = vunpack.c.h.b16 %v796
      %v1368 = vunpack.c.l.b16 %v797
      %v1369 = vunpack.c.h.b16 %v797
      %v1370 = vunpack.c.l.b16 %v798
      %v1371 = vunpack.c.h.b16 %v798
      %v1372 = vunpack.c.l.b16 %v799
      %v1373 = vunpack.c.h.b16 %v799
      %v1374 = vunpack.c.l.b16 %v800
      %v1375 = vunpack.c.h.b16 %v800
      %v1376 = vunpack.c.l.b16 %v801
      %v1377 = vunpack.c.h.b16 %v801
      %v1378 = vpack.c.b16 %v1102, %v1090
      %v1379 = vpack.c.b16 %v1103, %v1091
      %v1380 = vpack.c.b16 %v1104, %v1092
      %v1381 = vpack.c.b16 %v1105, %v1093
      %v1382 = vpack.c.b16 %v1106, %v1094
      %v1383 = vpack.c.b16 %v1107, %v1095
      %v1384 = vpack.c.b16 %v1108, %v1096
      %v1385 = vpack.c.b16 %v1109, %v1097
      %v1386 = vpack.c.b16 %v1110, %v1098
      %v1387 = vpack.c.b16 %v1111, %v1099
      %v1388 = vpack.c.b16 %v1112, %v1100
      %v1389 = vpack.c.b16 %v1113, %v1101
      %v1390 = vpack.c.b16 %v1126, %v1114
      %v1391 = vpack.c.b16 %v1127, %v1115
      %v1392 = vpack.c.b16 %v1128, %v1116
      %v1393 = vpack.c.b16 %v1129, %v1117
      %v1394 = vpack.c.b16 %v1130, %v1118
      %v1395 = vpack.c.b16 %v1131, %v1119
      %v1396 = vpack.c.b16 %v1132, %v1120
      %v1397 = vpack.c.b16 %v1133, %v1121
      %v1398 = vpack.c.b16 %v1134, %v1122
      %v1399 = vpack.c.b16 %v1135, %v1123
      %v1400 = vpack.c.b16 %v1136, %v1124
      %v1401 = vpack.c.b16 %v1137, %v1125
      %v1402 = vpack.c.b16 %v1150, %v1138
      %v1403 = vpack.c.b16 %v1151, %v1139
      %v1404 = vpack.c.b16 %v1152, %v1140
      %v1405 = vpack.c.b16 %v1153, %v1141
      %v1406 = vpack.c.b16 %v1154, %v1142
      %v1407 = vpack.c.b16 %v1155, %v1143
      %v1408 = vpack.c.b16 %v1156, %v1144
      %v1409 = vpack.c.b16 %v1157, %v1145
      %v1410 = vpack.c.b16 %v1158, %v1146
      %v1411 = vpack.c.b16 %v1159, %v1147
      %v1412 = vpack.c.b16 %v1160, %v1148
      %v1413 = vpack.c.b16 %v1161, %v1149
      %v1414 = vpack.c.b16 %v1174, %v1162
      %v1415 = vpack.c.b16 %v1175, %v1163
      %v1416 = vpack.c.b16 %v1176, %v1164
      %v1417 = vpack.c.b16 %v1177, %v1165
      %v1418 = vpack.c.b16 %v1178, %v1166
      %v1419 = vpack.c.b16 %v1179, %v1167
      %v1420 = vpack.c.b16 %v1180, %v1168
      %v1421 = vpack.c.b16 %v1181, %v1169
      %v1422 = vpack.c.b16 %v1182, %v1170
      %v1423 = vpack.c.b16 %v1183, %v1171
      %v1424 = vpack.c.b16 %v1184, %v1172
      %v1425 = vpack.c.b16 %v1185, %v1173
      %v1426 = vpack.c.b16 %v1198, %v1186
      %v1427 = vpack.c.b16 %v1199, %v1187
      %v1428 = vpack.c.b16 %v1200, %v1188
      %v1429 = vpack.c.b16 %v1201, %v1189
      %v1430 = vpack.c.b16 %v1202, %v1190
      %v1431 = vpack.c.b16 %v1203, %v1191
      %v1432 = vpack.c.b16 %v1204, %v1192
      %v1433 = vpack.c.b16 %v1205, %v1193
      %v1434 = vpack.c.b16 %v1206, %v1194
      %v1435 = vpack.c.b16 %v1207, %v1195
      %v1436 = vpack.c.b16 %v1208, %v1196
      %v1437 = vpack.c.b16 %v1209, %v1197
      %v1438 = vpack.c.b16 %v1222, %v1210
      %v1439 = vpack.c.b16 %v1223, %v1211
      %v1440 = vpack.c.b16 %v1224, %v1212
      %v1441 = vpack.c.b16 %v1225, %v1213
      %v1442 = vpack.c.b16 %v1226, %v1214
      %v1443 = vpack.c.b16 %v1227, %v1215
      %v1444 = vpack.c.b16 %v1228, %v1216
      %v1445 = vpack.c.b16 %v1229, %v1217
      %v1446 = vpack.c.b16 %v1230, %v1218
      %v1447 = vpack.c.b16 %v1231, %v1219
      %v1448 = vpack.c.b16 %v1232, %v1220
      %v1449 = vpack.c.b16 %v1233, %v1221
      %v1450 = vpack.c.b16 %v1246, %v1234
      %v1451 = vpack.c.b16 %v1247, %v1235
      %v1452 = vpack.c.b16 %v1248, %v1236
      %v1453 = vpack.c.b16 %v1249, %v1237
      %v1454 = vpack.c.b16 %v1250, %v1238
      %v1455 = vpack.c.b16 %v1251, %v1239
      %v1456 = vpack.c.b16 %v1252, %v1240
      %v1457 = vpack.c.b16 %v1253, %v1241
      %v1458 = vpack.c.b16 %v1254, %v1242
      %v1459 = vpack.c.b16 %v1255, %v1243
      %v1460 = vpack.c.b16 %v1256, %v1244
      %v1461 = vpack.c.b16 %v1257, %v1245
      %v1462 = vpack.c.b16 %v1270, %v1258
      %v1463 = vpack.c.b16 %v1271, %v1259
      %v1464 = vpack.c.b16 %v1272, %v1260
      %v1465 = vpack.c.b16 %v1273, %v1261
      %v1466 = vpack.c.b16 %v1274, %v1262
      %v1467 = vpack.c.b16 %v1275, %v1263
      %v1468 = vpack.c.b16 %v1276, %v1264
      %v1469 = vpack.c.b16 %v1277, %v1265
      %v1470 = vpack.c.b16 %v1278, %v1266
      %v1471 = vpack.c.b16 %v1279, %v1267
      %v1472 = vpack.c.b16 %v1280, %v1268
      %v1473 = vpack.c.b16 %v1281, %v1269
      %v1474 = vpack.c.b16 %v1294, %v1282
      %v1475 = vpack.c.b16 %v1295, %v1283
      %v1476 = vpack.c.b16 %v1296, %v1284
      %v1477 = vpack.c.b16 %v1297, %v1285
      %v1478 = vpack.c.b16 %v1298, %v1286
      %v1479 = vpack.c.b16 %v1299, %v1287
      %v1480 = vpack.c.b16 %v1300, %v1288
      %v1481 = vpack.c.b16 %v1301, %v1289
      %v1482 = vpack.c.b16 %v1302, %v1290
      %v1483 = vpack.c.b16 %v1303, %v1291
      %v1484 = vpack.c.b16 %v1304, %v1292
      %v1485 = vpack.c.b16 %v1305, %v1293
      %v1486 = vpack.c.b16 %v1318, %v1306
      %v1487 = vpack.c.b16 %v1319, %v1307
      %v1488 = vpack.c.b16 %v1320, %v1308
      %v1489 = vpack.c.b16 %v1321, %v1309
      %v1490 = vpack.c.b16 %v1322, %v1310
      %v1491 = vpack.c.b16 %v1323, %v1311
      %v1492 = vpack.c.b16 %v1324, %v1312
      %v1493 = vpack.c.b16 %v1325, %v1313
      %v1494 = vpack.c.b16 %v1326, %v1314
      %v1495 = vpack.c.b16 %v1327, %v1315
      %v1496 = vpack.c.b16 %v1328, %v1316
      %v1497 = vpack.c.b16 %v1329, %v1317
      %v1498 = vpack.c.b16 %v1342, %v1330
      %v1499 = vpack.c.b16 %v1343, %v1331
      %v1500 = vpack.c.b16 %v1344, %v1332
      %v1501 = vpack.c.b16 %v1345, %v1333
      %v1502 = vpack.c.b16 %v1346, %v1334
      %v1503 = vpack.c.b16 %v1347, %v1335
      %v1504 = vpack.c.b16 %v1348, %v1336
      %v1505 = vpack.c.b16 %v1349, %v1337
      %v1506 = vpack.c.b16 %v1350, %v1338
      %v1507 = vpack.c.b16 %v1351, %v1339
      %v1508 = vpack.c.b16 %v1352, %v1340
      %v1509 = vpack.c.b16 %v1353, %v1341
      %v1510 = vpack.c.b16 %v1366, %v1354
      %v1511 = vpack.c.b16 %v1367, %v1355
      %v1512 = vpack.c.b16 %v1368, %v1356
      %v1513 = vpack.c.b16 %v1369, %v1357
      %v1514 = vpack.c.b16 %v1370, %v1358
      %v1515 = vpack.c.b16 %v1371, %v1359
      %v1516 = vpack.c.b16 %v1372, %v1360
      %v1517 = vpack.c.b16 %v1373, %v1361
      %v1518 = vpack.c.b16 %v1374, %v1362
      %v1519 = vpack.c.b16 %v1375, %v1363
      %v1520 = vpack.c.b16 %v1376, %v1364
      %v1521 = vpack.c.b16 %v1377, %v1365
      %1666 = vmatprep.subr.bf16.mxu0 %v503
      %1667 = vmatpush1.bf16.xpose.msra.mxu0 %v502
      %1668 = vmatprep.subr.bf16.mxu0 %v515
      %1669 = vmatpush1.bf16.xpose.msra.mxu0 %v514
      %1670 = vmatprep.subr.bf16.mxu0 %v527
      %1671 = vmatpush1.bf16.xpose.msra.mxu0 %v526
      %1672 = vmatprep.subr.bf16.mxu0 %v539
      %1673 = vmatpush1.bf16.xpose.msra.mxu0 %v538
      %1674 = vmatprep.subr.bf16.mxu0 %v551
      %1675 = vmatpush1.bf16.xpose.msra.mxu0 %v550
      %1676 = vmatprep.subr.bf16.mxu0 %v563
      %1677 = vmatpush1.bf16.xpose.msra.mxu0 %v562
      %1678 = vmatprep.subr.bf16.mxu0 %v575
      %1679 = vmatpush1.bf16.xpose.msra.mxu0 %v574
      %1680 = vmatprep.subr.bf16.mxu0 %v587
      %1681 = vmatpush1.bf16.xpose.msra.mxu0 %v586
      %1682 = vmatprep.subr.bf16.mxu0 %v599
      %1683 = vmatpush1.bf16.xpose.msra.mxu0 %v598
      %1684 = vmatprep.subr.bf16.mxu0 %v611
      %1685 = vmatpush1.bf16.xpose.msra.mxu0 %v610
      %1686 = vmatprep.subr.bf16.mxu0 %v623
      %1687 = vmatpush1.bf16.xpose.msra.mxu0 %v622
      %1688 = vmatprep.subr.bf16.mxu0 %v635
      %1689 = vmatpush1.bf16.xpose.msra.mxu0 %v634
      %1690 = vmatprep.subr.bf16.mxu0 %v647
      %1691 = vmatpush1.bf16.xpose.msra.mxu0 %v646
      %1692 = vmatprep.subr.bf16.mxu0 0
      %1693 = vmatpush1.bf16.xpose.msra.mxu0 0
      %1694 = vmatprep.subr.bf16.mxu0 0
      %1695 = vmatpush1.bf16.xpose.msra.mxu0 0
      %1696 = vmatprep.subr.bf16.mxu0 0
      %1697 = vmatpush1.bf16.xpose.msra.mxu0 0
      %1698 = vmatprep.mubr.bf16.mxu0 %v1379
      %1699 = vmatmul.mubr.bf16.gmra.mrb[0].mxu0 %v1378
      %v1700 = vpop.f32.mrb[0].mxu0
      %v1701 = vadd.f32 %v829, %v1700
      %v1702 = vpop.f32.mrb[0].mxu0
      %v1703 = vadd.f32 %v829, %v1702
      %v1704 = vpop.f32.mrb[0].mxu0
      %v1705 = vadd.f32 %v834, %v1704
      %v1706 = vpop.f32.mrb[0].mxu0
      %v1707 = vadd.f32 %v834, %v1706
      %1708 = vmatprep.mubr.bf16.mxu0 %v1391
      %1709 = vmatmul.mubr.bf16.gmra.mrb[0].mxu0 %v1390
      %v1710 = vpop.f32.mrb[0].mxu0
      %v1711 = vadd.f32 %v839, %v1710
      %v1712 = vpop.f32.mrb[0].mxu0
      %v1713 = vadd.f32 %v839, %v1712
      %v1714 = vpop.f32.mrb[0].mxu0
      %v1715 = vadd.f32 %v844, %v1714
      %v1716 = vpop.f32.mrb[0].mxu0
      %v1717 = vadd.f32 %v844, %v1716
      %1718 = vmatprep.mubr.bf16.mxu0 %v1403
      %1719 = vmatmul.mubr.bf16.gmra.mrb[0].mxu0 %v1402
      %v1720 = vpop.f32.mrb[0].mxu0
      %v1721 = vadd.f32 %v849, %v1720
      %v1722 = vpop.f32.mrb[0].mxu0
      %v1723 = vadd.f32 %v849, %v1722
      %v1724 = vpop.f32.mrb[0].mxu0
      %v1725 = vadd.f32 %v854, %v1724
      %v1726 = vpop.f32.mrb[0].mxu0
      %v1727 = vadd.f32 %v854, %v1726
      %1728 = vmatprep.mubr.bf16.mxu0 %v1415
      %1729 = vmatmul.mubr.bf16.gmra.mrb[0].mxu0 %v1414
      %v1730 = vpop.f32.mrb[0].mxu0
      %v1731 = vadd.f32 %v859, %v1730
      %v1732 = vpop.f32.mrb[0].mxu0
      %v1733 = vadd.f32 %v859, %v1732
      %v1734 = vpop.f32.mrb[0].mxu0
      %v1735 = vadd.f32 %v864, %v1734
      %v1736 = vpop.f32.mrb[0].mxu0
      %v1737 = vadd.f32 %v864, %v1736
      %1738 = vmatprep.mubr.bf16.mxu0 %v1427
      %1739 = vmatmul.mubr.bf16.gmra.mrb[0].mxu0 %v1426
      %v1740 = vpop.f32.mrb[0].mxu0
      %v1741 = vadd.f32 %v869, %v1740
      %v1742 = vpop.f32.mrb[0].mxu0
      %v1743 = vadd.f32 %v869, %v1742
      %v1744 = vpop.f32.mrb[0].mxu0
      %v1745 = vadd.f32 %v874, %v1744
      %v1746 = vpop.f32.mrb[0].mxu0
      %v1747 = vadd.f32 %v874, %v1746
      %1748 = vmatprep.mubr.bf16.mxu0 %v1439
      %1749 = vmatmul.mubr.bf16.gmra.mrb[0].mxu0 %v1438
      %v1750 = vpop.f32.mrb[0].mxu0
      %v1751 = vadd.f32 %v879, %v1750
      %v1752 = vpop.f32.mrb[0].mxu0
      %v1753 = vadd.f32 %v879, %v1752
      %v1754 = vpop.f32.mrb[0].mxu0
      %v1755 = vadd.f32 %v884, %v1754
      %v1756 = vpop.f32.mrb[0].mxu0
      %v1757 = vadd.f32 %v884, %v1756
      %1758 = vmatprep.mubr.bf16.mxu0 %v1451
      %1759 = vmatmul.mubr.bf16.gmra.mrb[0].mxu0 %v1450
      %v1760 = vpop.f32.mrb[0].mxu0
      %v1761 = vadd.f32 %v889, %v1760
      %v1762 = vpop.f32.mrb[0].mxu0
      %v1763 = vadd.f32 %v889, %v1762
      %v1764 = vpop.f32.mrb[0].mxu0
      %v1765 = vadd.f32 %v894, %v1764
      %v1766 = vpop.f32.mrb[0].mxu0
      %v1767 = vadd.f32 %v894, %v1766
      %1768 = vmatprep.mubr.bf16.mxu0 %v1463
      %1769 = vmatmul.mubr.bf16.gmra.mrb[0].mxu0 %v1462
      %v1770 = vpop.f32.mrb[0].mxu0
      %v1771 = vadd.f32 %v899, %v1770
      %v1772 = vpop.f32.mrb[0].mxu0
      %v1773 = vadd.f32 %v899, %v1772
      %v1774 = vpop.f32.mrb[0].mxu0
      %v1775 = vadd.f32 %v904, %v1774
      %v1776 = vpop.f32.mrb[0].mxu0
      %v1777 = vadd.f32 %v904, %v1776
      %1778 = vmatprep.mubr.bf16.mxu0 %v1475
      %1779 = vmatmul.mubr.bf16.gmra.mrb[0].mxu0 %v1474
      %v1780 = vpop.f32.mrb[0].mxu0
      %v1781 = vadd.f32 %v909, %v1780
      %v1782 = vpop.f32.mrb[0].mxu0
      %v1783 = vadd.f32 %v909, %v1782
      %v1784 = vpop.f32.mrb[0].mxu0
      %v1785 = vadd.f32 %v914, %v1784
      %v1786 = vpop.f32.mrb[0].mxu0
      %v1787 = vadd.f32 %v914, %v1786
      %1788 = vmatprep.mubr.bf16.mxu0 %v1487
      %1789 = vmatmul.mubr.bf16.gmra.mrb[0].mxu0 %v1486
      %v1790 = vpop.f32.mrb[0].mxu0
      %v1791 = vadd.f32 %v919, %v1790
      %v1792 = vpop.f32.mrb[0].mxu0
      %v1793 = vadd.f32 %v919, %v1792
      %v1794 = vpop.f32.mrb[0].mxu0
      %v1795 = vadd.f32 %v924, %v1794
      %v1796 = vpop.f32.mrb[0].mxu0
      %v1797 = vadd.f32 %v924, %v1796
      %1798 = vmatprep.mubr.bf16.mxu0 %v1499
      %1799 = vmatmul.mubr.bf16.gmra.mrb[0].mxu0 %v1498
      %v1800 = vpop.f32.mrb[0].mxu0
      %v1801 = vadd.f32 %v929, %v1800
      %v1802 = vpop.f32.mrb[0].mxu0
      %v1803 = vadd.f32 %v929, %v1802
      %v1804 = vpop.f32.mrb[0].mxu0
      %v1805 = vadd.f32 %v934, %v1804
      %v1806 = vpop.f32.mrb[0].mxu0
      %v1807 = vadd.f32 %v934, %v1806
      %1808 = vmatprep.mubr.bf16.mxu0 %v1511
      %1809 = vmatmul.mubr.bf16.gmra.mrb[0].mxu0 %v1510
      %v1810 = vpop.f32.mrb[0].mxu0
      %v1811 = vadd.f32 %v939, %v1810
      %v1812 = vpop.f32.mrb[0].mxu0
      %v1813 = vadd.f32 %v939, %v1812
      %v1814 = vpop.f32.mrb[0].mxu0
      %v1815 = vadd.f32 %v944, %v1814
      %v1816 = vpop.f32.mrb[0].mxu0
      %v1817 = vadd.f32 %v944, %v1816
      %1818 = vdwg.mxu0
      %1819 = vmatprep.subr.bf16.mxu0 %v505
      %1820 = vmatpush1.bf16.xpose.msra.mxu0 %v504
      %1821 = vmatprep.subr.bf16.mxu0 %v517
      %1822 = vmatpush1.bf16.xpose.msra.mxu0 %v516
      %1823 = vmatprep.subr.bf16.mxu0 %v529
      %1824 = vmatpush1.bf16.xpose.msra.mxu0 %v528
      %1825 = vmatprep.subr.bf16.mxu0 %v541
      %1826 = vmatpush1.bf16.xpose.msra.mxu0 %v540
      %1827 = vmatprep.subr.bf16.mxu0 %v553
      %1828 = vmatpush1.bf16.xpose.msra.mxu0 %v552
      %1829 = vmatprep.subr.bf16.mxu0 %v565
      %1830 = vmatpush1.bf16.xpose.msra.mxu0 %v564
      %1831 = vmatprep.subr.bf16.mxu0 %v577
      %1832 = vmatpush1.bf16.xpose.msra.mxu0 %v576
      %1833 = vmatprep.subr.bf16.mxu0 %v589
      %1834 = vmatpush1.bf16.xpose.msra.mxu0 %v588
      %1835 = vmatprep.subr.bf16.mxu0 %v601
      %1836 = vmatpush1.bf16.xpose.msra.mxu0 %v600
      %1837 = vmatprep.subr.bf16.mxu0 %v613
      %1838 = vmatpush1.bf16.xpose.msra.mxu0 %v612
      %1839 = vmatprep.subr.bf16.mxu0 %v625
      %1840 = vmatpush1.bf16.xpose.msra.mxu0 %v624
      %1841 = vmatprep.subr.bf16.mxu0 %v637
      %1842 = vmatpush1.bf16.xpose.msra.mxu0 %v636
      %1843 = vmatprep.subr.bf16.mxu0 %v649
      %1844 = vmatpush1.bf16.xpose.msra.mxu0 %v648
      %1845 = vmatprep.subr.bf16.mxu0 0
      %1846 = vmatpush1.bf16.xpose.msra.mxu0 0
      %1847 = vmatprep.subr.bf16.mxu0 0
      %1848 = vmatpush1.bf16.xpose.msra.mxu0 0
      %1849 = vmatprep.subr.bf16.mxu0 0
      %1850 = vmatpush1.bf16.xpose.msra.mxu0 0
      %1851 = vmatprep.mubr.bf16.mxu0 %v1381
      %1852 = vmatmul.mubr.bf16.gmra.mrb[0].mxu0 %v1380
      %v1853 = vpop.f32.mrb[0].mxu0
      %v1854 = vadd.f32 %v1701, %v1853
      %v1855 = vpop.f32.mrb[0].mxu0
      %v1856 = vadd.f32 %v1703, %v1855
      %v1857 = vpop.f32.mrb[0].mxu0
      %v1858 = vadd.f32 %v1705, %v1857
      %v1859 = vpop.f32.mrb[0].mxu0
      %v1860 = vadd.f32 %v1707, %v1859
      %1861 = vmatprep.mubr.bf16.mxu0 %v1393
      %1862 = vmatmul.mubr.bf16.gmra.mrb[0].mxu0 %v1392
      %v1863 = vpop.f32.mrb[0].mxu0
      %v1864 = vadd.f32 %v1711, %v1863
      %v1865 = vpop.f32.mrb[0].mxu0
      %v1866 = vadd.f32 %v1713, %v1865
      %v1867 = vpop.f32.mrb[0].mxu0
      %v1868 = vadd.f32 %v1715, %v1867
      %v1869 = vpop.f32.mrb[0].mxu0
      %v1870 = vadd.f32 %v1717, %v1869
      %1871 = vmatprep.mubr.bf16.mxu0 %v1405
      %1872 = vmatmul.mubr.bf16.gmra.mrb[0].mxu0 %v1404
      %v1873 = vpop.f32.mrb[0].mxu0
      %v1874 = vadd.f32 %v1721, %v1873
      %v1875 = vpop.f32.mrb[0].mxu0
      %v1876 = vadd.f32 %v1723, %v1875
      %v1877 = vpop.f32.mrb[0].mxu0
      %v1878 = vadd.f32 %v1725, %v1877
      %v1879 = vpop.f32.mrb[0].mxu0
      %v1880 = vadd.f32 %v1727, %v1879
      %1881 = vmatprep.mubr.bf16.mxu0 %v1417
      %1882 = vmatmul.mubr.bf16.gmra.mrb[0].mxu0 %v1416
      %v1883 = vpop.f32.mrb[0].mxu0
      %v1884 = vadd.f32 %v1731, %v1883
      %v1885 = vpop.f32.mrb[0].mxu0
      %v1886 = vadd.f32 %v1733, %v1885
      %v1887 = vpop.f32.mrb[0].mxu0
      %v1888 = vadd.f32 %v1735, %v1887
      %v1889 = vpop.f32.mrb[0].mxu0
      %v1890 = vadd.f32 %v1737, %v1889
      %1891 = vmatprep.mubr.bf16.mxu0 %v1429
      %1892 = vmatmul.mubr.bf16.gmra.mrb[0].mxu0 %v1428
      %v1893 = vpop.f32.mrb[0].mxu0
      %v1894 = vadd.f32 %v1741, %v1893
      %v1895 = vpop.f32.mrb[0].mxu0
      %v1896 = vadd.f32 %v1743, %v1895
      %v1897 = vpop.f32.mrb[0].mxu0
      %v1898 = vadd.f32 %v1745, %v1897
      %v1899 = vpop.f32.mrb[0].mxu0
      %v1900 = vadd.f32 %v1747, %v1899
      %1901 = vmatprep.mubr.bf16.mxu0 %v1441
      %1902 = vmatmul.mubr.bf16.gmra.mrb[0].mxu0 %v1440
      %v1903 = vpop.f32.mrb[0].mxu0
      %v1904 = vadd.f32 %v1751, %v1903
      %v1905 = vpop.f32.mrb[0].mxu0
      %v1906 = vadd.f32 %v1753, %v1905
      %v1907 = vpop.f32.mrb[0].mxu0
      %v1908 = vadd.f32 %v1755, %v1907
      %v1909 = vpop.f32.mrb[0].mxu0
      %v1910 = vadd.f32 %v1757, %v1909
      %1911 = vmatprep.mubr.bf16.mxu0 %v1453
      %1912 = vmatmul.mubr.bf16.gmra.mrb[0].mxu0 %v1452
      %v1913 = vpop.f32.mrb[0].mxu0
      %v1914 = vadd.f32 %v1761, %v1913
      %v1915 = vpop.f32.mrb[0].mxu0
      %v1916 = vadd.f32 %v1763, %v1915
      %v1917 = vpop.f32.mrb[0].mxu0
      %v1918 = vadd.f32 %v1765, %v1917
      %v1919 = vpop.f32.mrb[0].mxu0
      %v1920 = vadd.f32 %v1767, %v1919
      %1921 = vmatprep.mubr.bf16.mxu0 %v1465
      %1922 = vmatmul.mubr.bf16.gmra.mrb[0].mxu0 %v1464
      %v1923 = vpop.f32.mrb[0].mxu0
      %v1924 = vadd.f32 %v1771, %v1923
      %v1925 = vpop.f32.mrb[0].mxu0
      %v1926 = vadd.f32 %v1773, %v1925
      %v1927 = vpop.f32.mrb[0].mxu0
      %v1928 = vadd.f32 %v1775, %v1927
      %v1929 = vpop.f32.mrb[0].mxu0
      %v1930 = vadd.f32 %v1777, %v1929
      %1931 = vmatprep.mubr.bf16.mxu0 %v1477
      %1932 = vmatmul.mubr.bf16.gmra.mrb[0].mxu0 %v1476
      %v1933 = vpop.f32.mrb[0].mxu0
      %v1934 = vadd.f32 %v1781, %v1933
      %v1935 = vpop.f32.mrb[0].mxu0
      %v1936 = vadd.f32 %v1783, %v1935
      %v1937 = vpop.f32.mrb[0].mxu0
      %v1938 = vadd.f32 %v1785, %v1937
      %v1939 = vpop.f32.mrb[0].mxu0
      %v1940 = vadd.f32 %v1787, %v1939
      %1941 = vmatprep.mubr.bf16.mxu0 %v1489
      %1942 = vmatmul.mubr.bf16.gmra.mrb[0].mxu0 %v1488
      %v1943 = vpop.f32.mrb[0].mxu0
      %v1944 = vadd.f32 %v1791, %v1943
      %v1945 = vpop.f32.mrb[0].mxu0
      %v1946 = vadd.f32 %v1793, %v1945
      %v1947 = vpop.f32.mrb[0].mxu0
      %v1948 = vadd.f32 %v1795, %v1947
      %v1949 = vpop.f32.mrb[0].mxu0
      %v1950 = vadd.f32 %v1797, %v1949
      %1951 = vmatprep.mubr.bf16.mxu0 %v1501
      %1952 = vmatmul.mubr.bf16.gmra.mrb[0].mxu0 %v1500
      %v1953 = vpop.f32.mrb[0].mxu0
      %v1954 = vadd.f32 %v1801, %v1953
      %v1955 = vpop.f32.mrb[0].mxu0
      %v1956 = vadd.f32 %v1803, %v1955
      %v1957 = vpop.f32.mrb[0].mxu0
      %v1958 = vadd.f32 %v1805, %v1957
      %v1959 = vpop.f32.mrb[0].mxu0
      %v1960 = vadd.f32 %v1807, %v1959
      %1961 = vmatprep.mubr.bf16.mxu0 %v1513
      %1962 = vmatmul.mubr.bf16.gmra.mrb[0].mxu0 %v1512
      %v1963 = vpop.f32.mrb[0].mxu0
      %v1964 = vadd.f32 %v1811, %v1963
      %v1965 = vpop.f32.mrb[0].mxu0
      %v1966 = vadd.f32 %v1813, %v1965
      %v1967 = vpop.f32.mrb[0].mxu0
      %v1968 = vadd.f32 %v1815, %v1967
      %v1969 = vpop.f32.mrb[0].mxu0
      %v1970 = vadd.f32 %v1817, %v1969
      %1971 = vdwg.mxu0
      %1972 = vmatprep.subr.bf16.mxu0 %v507
      %1973 = vmatpush1.bf16.xpose.msra.mxu0 %v506
      %1974 = vmatprep.subr.bf16.mxu0 %v519
      %1975 = vmatpush1.bf16.xpose.msra.mxu0 %v518
      %1976 = vmatprep.subr.bf16.mxu0 %v531
      %1977 = vmatpush1.bf16.xpose.msra.mxu0 %v530
      %1978 = vmatprep.subr.bf16.mxu0 %v543
      %1979 = vmatpush1.bf16.xpose.msra.mxu0 %v542
      %1980 = vmatprep.subr.bf16.mxu0 %v555
      %1981 = vmatpush1.bf16.xpose.msra.mxu0 %v554
      %1982 = vmatprep.subr.bf16.mxu0 %v567
      %1983 = vmatpush1.bf16.xpose.msra.mxu0 %v566
      %1984 = vmatprep.subr.bf16.mxu0 %v579
      %1985 = vmatpush1.bf16.xpose.msra.mxu0 %v578
      %1986 = vmatprep.subr.bf16.mxu0 %v591
      %1987 = vmatpush1.bf16.xpose.msra.mxu0 %v590
      %1988 = vmatprep.subr.bf16.mxu0 %v603
      %1989 = vmatpush1.bf16.xpose.msra.mxu0 %v602
      %1990 = vmatprep.subr.bf16.mxu0 %v615
      %1991 = vmatpush1.bf16.xpose.msra.mxu0 %v614
      %1992 = vmatprep.subr.bf16.mxu0 %v627
      %1993 = vmatpush1.bf16.xpose.msra.mxu0 %v626
      %1994 = vmatprep.subr.bf16.mxu0 %v639
      %1995 = vmatpush1.bf16.xpose.msra.mxu0 %v638
      %1996 = vmatprep.subr.bf16.mxu0 %v651
      %1997 = vmatpush1.bf16.xpose.msra.mxu0 %v650
      %1998 = vmatprep.subr.bf16.mxu0 0
      %1999 = vmatpush1.bf16.xpose.msra.mxu0 0
      %2000 = vmatprep.subr.bf16.mxu0 0
      %2001 = vmatpush1.bf16.xpose.msra.mxu0 0
      %2002 = vmatprep.subr.bf16.mxu0 0
      %2003 = vmatpush1.bf16.xpose.msra.mxu0 0
      %2004 = vmatprep.mubr.bf16.mxu0 %v1383
      %2005 = vmatmul.mubr.bf16.gmra.mrb[0].mxu0 %v1382
      %v2006 = vpop.f32.mrb[0].mxu0
      %v2007 = vadd.f32 %v1854, %v2006
      %v2008 = vpop.f32.mrb[0].mxu0
      %v2009 = vadd.f32 %v1856, %v2008
      %v2010 = vpop.f32.mrb[0].mxu0
      %v2011 = vadd.f32 %v1858, %v2010
      %v2012 = vpop.f32.mrb[0].mxu0
      %v2013 = vadd.f32 %v1860, %v2012
      %2014 = vmatprep.mubr.bf16.mxu0 %v1395
      %2015 = vmatmul.mubr.bf16.gmra.mrb[0].mxu0 %v1394
      %v2016 = vpop.f32.mrb[0].mxu0
      %v2017 = vadd.f32 %v1864, %v2016
      %v2018 = vpop.f32.mrb[0].mxu0
      %v2019 = vadd.f32 %v1866, %v2018
      %v2020 = vpop.f32.mrb[0].mxu0
      %v2021 = vadd.f32 %v1868, %v2020
      %v2022 = vpop.f32.mrb[0].mxu0
      %v2023 = vadd.f32 %v1870, %v2022
      %2024 = vmatprep.mubr.bf16.mxu0 %v1407
      %2025 = vmatmul.mubr.bf16.gmra.mrb[0].mxu0 %v1406
      %v2026 = vpop.f32.mrb[0].mxu0
      %v2027 = vadd.f32 %v1874, %v2026
      %v2028 = vpop.f32.mrb[0].mxu0
      %v2029 = vadd.f32 %v1876, %v2028
      %v2030 = vpop.f32.mrb[0].mxu0
      %v2031 = vadd.f32 %v1878, %v2030
      %v2032 = vpop.f32.mrb[0].mxu0
      %v2033 = vadd.f32 %v1880, %v2032
      %2034 = vmatprep.mubr.bf16.mxu0 %v1419
      %2035 = vmatmul.mubr.bf16.gmra.mrb[0].mxu0 %v1418
      %v2036 = vpop.f32.mrb[0].mxu0
      %v2037 = vadd.f32 %v1884, %v2036
      %v2038 = vpop.f32.mrb[0].mxu0
      %v2039 = vadd.f32 %v1886, %v2038
      %v2040 = vpop.f32.mrb[0].mxu0
      %v2041 = vadd.f32 %v1888, %v2040
      %v2042 = vpop.f32.mrb[0].mxu0
      %v2043 = vadd.f32 %v1890, %v2042
      %2044 = vmatprep.mubr.bf16.mxu0 %v1431
      %2045 = vmatmul.mubr.bf16.gmra.mrb[0].mxu0 %v1430
      %v2046 = vpop.f32.mrb[0].mxu0
      %v2047 = vadd.f32 %v1894, %v2046
      %v2048 = vpop.f32.mrb[0].mxu0
      %v2049 = vadd.f32 %v1896, %v2048
      %v2050 = vpop.f32.mrb[0].mxu0
      %v2051 = vadd.f32 %v1898, %v2050
      %v2052 = vpop.f32.mrb[0].mxu0
      %v2053 = vadd.f32 %v1900, %v2052
      %2054 = vmatprep.mubr.bf16.mxu0 %v1443
      %2055 = vmatmul.mubr.bf16.gmra.mrb[0].mxu0 %v1442
      %v2056 = vpop.f32.mrb[0].mxu0
      %v2057 = vadd.f32 %v1904, %v2056
      %v2058 = vpop.f32.mrb[0].mxu0
      %v2059 = vadd.f32 %v1906, %v2058
      %v2060 = vpop.f32.mrb[0].mxu0
      %v2061 = vadd.f32 %v1908, %v2060
      %v2062 = vpop.f32.mrb[0].mxu0
      %v2063 = vadd.f32 %v1910, %v2062
      %2064 = vmatprep.mubr.bf16.mxu0 %v1455
      %2065 = vmatmul.mubr.bf16.gmra.mrb[0].mxu0 %v1454
      %v2066 = vpop.f32.mrb[0].mxu0
      %v2067 = vadd.f32 %v1914, %v2066
      %v2068 = vpop.f32.mrb[0].mxu0
      %v2069 = vadd.f32 %v1916, %v2068
      %v2070 = vpop.f32.mrb[0].mxu0
      %v2071 = vadd.f32 %v1918, %v2070
      %v2072 = vpop.f32.mrb[0].mxu0
      %v2073 = vadd.f32 %v1920, %v2072
      %2074 = vmatprep.mubr.bf16.mxu0 %v1467
      %2075 = vmatmul.mubr.bf16.gmra.mrb[0].mxu0 %v1466
      %v2076 = vpop.f32.mrb[0].mxu0
      %v2077 = vadd.f32 %v1924, %v2076
      %v2078 = vpop.f32.mrb[0].mxu0
      %v2079 = vadd.f32 %v1926, %v2078
      %v2080 = vpop.f32.mrb[0].mxu0
      %v2081 = vadd.f32 %v1928, %v2080
      %v2082 = vpop.f32.mrb[0].mxu0
      %v2083 = vadd.f32 %v1930, %v2082
      %2084 = vmatprep.mubr.bf16.mxu0 %v1479
      %2085 = vmatmul.mubr.bf16.gmra.mrb[0].mxu0 %v1478
      %v2086 = vpop.f32.mrb[0].mxu0
      %v2087 = vadd.f32 %v1934, %v2086
      %v2088 = vpop.f32.mrb[0].mxu0
      %v2089 = vadd.f32 %v1936, %v2088
      %v2090 = vpop.f32.mrb[0].mxu0
      %v2091 = vadd.f32 %v1938, %v2090
      %v2092 = vpop.f32.mrb[0].mxu0
      %v2093 = vadd.f32 %v1940, %v2092
      %2094 = vmatprep.mubr.bf16.mxu0 %v1491
      %2095 = vmatmul.mubr.bf16.gmra.mrb[0].mxu0 %v1490
      %v2096 = vpop.f32.mrb[0].mxu0
      %v2097 = vadd.f32 %v1944, %v2096
      %v2098 = vpop.f32.mrb[0].mxu0
      %v2099 = vadd.f32 %v1946, %v2098
      %v2100 = vpop.f32.mrb[0].mxu0
      %v2101 = vadd.f32 %v1948, %v2100
      %v2102 = vpop.f32.mrb[0].mxu0
      %v2103 = vadd.f32 %v1950, %v2102
      %2104 = vmatprep.mubr.bf16.mxu0 %v1503
      %2105 = vmatmul.mubr.bf16.gmra.mrb[0].mxu0 %v1502
      %v2106 = vpop.f32.mrb[0].mxu0
      %v2107 = vadd.f32 %v1954, %v2106
      %v2108 = vpop.f32.mrb[0].mxu0
      %v2109 = vadd.f32 %v1956, %v2108
      %v2110 = vpop.f32.mrb[0].mxu0
      %v2111 = vadd.f32 %v1958, %v2110
      %v2112 = vpop.f32.mrb[0].mxu0
      %v2113 = vadd.f32 %v1960, %v2112
      %2114 = vmatprep.mubr.bf16.mxu0 %v1515
      %2115 = vmatmul.mubr.bf16.gmra.mrb[0].mxu0 %v1514
      %v2116 = vpop.f32.mrb[0].mxu0
      %v2117 = vadd.f32 %v1964, %v2116
      %v2118 = vpop.f32.mrb[0].mxu0
      %v2119 = vadd.f32 %v1966, %v2118
      %v2120 = vpop.f32.mrb[0].mxu0
      %v2121 = vadd.f32 %v1968, %v2120
      %v2122 = vpop.f32.mrb[0].mxu0
      %v2123 = vadd.f32 %v1970, %v2122
      %2124 = vdwg.mxu0
      %2125 = vmatprep.subr.bf16.mxu0 %v509
      %2126 = vmatpush1.bf16.xpose.msra.mxu0 %v508
      %2127 = vmatprep.subr.bf16.mxu0 %v521
      %2128 = vmatpush1.bf16.xpose.msra.mxu0 %v520
      %2129 = vmatprep.subr.bf16.mxu0 %v533
      %2130 = vmatpush1.bf16.xpose.msra.mxu0 %v532
      %2131 = vmatprep.subr.bf16.mxu0 %v545
      %2132 = vmatpush1.bf16.xpose.msra.mxu0 %v544
      %2133 = vmatprep.subr.bf16.mxu0 %v557
      %2134 = vmatpush1.bf16.xpose.msra.mxu0 %v556
      %2135 = vmatprep.subr.bf16.mxu0 %v569
      %2136 = vmatpush1.bf16.xpose.msra.mxu0 %v568
      %2137 = vmatprep.subr.bf16.mxu0 %v581
      %2138 = vmatpush1.bf16.xpose.msra.mxu0 %v580
      %2139 = vmatprep.subr.bf16.mxu0 %v593
      %2140 = vmatpush1.bf16.xpose.msra.mxu0 %v592
      %2141 = vmatprep.subr.bf16.mxu0 %v605
      %2142 = vmatpush1.bf16.xpose.msra.mxu0 %v604
      %2143 = vmatprep.subr.bf16.mxu0 %v617
      %2144 = vmatpush1.bf16.xpose.msra.mxu0 %v616
      %2145 = vmatprep.subr.bf16.mxu0 %v629
      %2146 = vmatpush1.bf16.xpose.msra.mxu0 %v628
      %2147 = vmatprep.subr.bf16.mxu0 %v641
      %2148 = vmatpush1.bf16.xpose.msra.mxu0 %v640
      %2149 = vmatprep.subr.bf16.mxu0 %v653
      %2150 = vmatpush1.bf16.xpose.msra.mxu0 %v652
      %2151 = vmatprep.subr.bf16.mxu0 0
      %2152 = vmatpush1.bf16.xpose.msra.mxu0 0
      %2153 = vmatprep.subr.bf16.mxu0 0
      %2154 = vmatpush1.bf16.xpose.msra.mxu0 0
      %2155 = vmatprep.subr.bf16.mxu0 0
      %2156 = vmatpush1.bf16.xpose.msra.mxu0 0
      %2157 = vmatprep.mubr.bf16.mxu0 %v1385
      %2158 = vmatmul.mubr.bf16.gmra.mrb[0].mxu0 %v1384
      %v2159 = vpop.f32.mrb[0].mxu0
      %v2160 = vadd.f32 %v2007, %v2159
      %v2161 = vpop.f32.mrb[0].mxu0
      %v2162 = vadd.f32 %v2009, %v2161
      %v2163 = vpop.f32.mrb[0].mxu0
      %v2164 = vadd.f32 %v2011, %v2163
      %v2165 = vpop.f32.mrb[0].mxu0
      %v2166 = vadd.f32 %v2013, %v2165
      %2167 = vmatprep.mubr.bf16.mxu0 %v1397
      %2168 = vmatmul.mubr.bf16.gmra.mrb[0].mxu0 %v1396
      %v2169 = vpop.f32.mrb[0].mxu0
      %v2170 = vadd.f32 %v2017, %v2169
      %v2171 = vpop.f32.mrb[0].mxu0
      %v2172 = vadd.f32 %v2019, %v2171
      %v2173 = vpop.f32.mrb[0].mxu0
      %v2174 = vadd.f32 %v2021, %v2173
      %v2175 = vpop.f32.mrb[0].mxu0
      %v2176 = vadd.f32 %v2023, %v2175
      %2177 = vmatprep.mubr.bf16.mxu0 %v1409
      %2178 = vmatmul.mubr.bf16.gmra.mrb[0].mxu0 %v1408
      %v2179 = vpop.f32.mrb[0].mxu0
      %v2180 = vadd.f32 %v2027, %v2179
      %v2181 = vpop.f32.mrb[0].mxu0
      %v2182 = vadd.f32 %v2029, %v2181
      %v2183 = vpop.f32.mrb[0].mxu0
      %v2184 = vadd.f32 %v2031, %v2183
      %v2185 = vpop.f32.mrb[0].mxu0
      %v2186 = vadd.f32 %v2033, %v2185
      %2187 = vmatprep.mubr.bf16.mxu0 %v1421
      %2188 = vmatmul.mubr.bf16.gmra.mrb[0].mxu0 %v1420
      %v2189 = vpop.f32.mrb[0].mxu0
      %v2190 = vadd.f32 %v2037, %v2189
      %v2191 = vpop.f32.mrb[0].mxu0
      %v2192 = vadd.f32 %v2039, %v2191
      %v2193 = vpop.f32.mrb[0].mxu0
      %v2194 = vadd.f32 %v2041, %v2193
      %v2195 = vpop.f32.mrb[0].mxu0
      %v2196 = vadd.f32 %v2043, %v2195
      %2197 = vmatprep.mubr.bf16.mxu0 %v1433
      %2198 = vmatmul.mubr.bf16.gmra.mrb[0].mxu0 %v1432
      %v2199 = vpop.f32.mrb[0].mxu0
      %v2200 = vadd.f32 %v2047, %v2199
      %v2201 = vpop.f32.mrb[0].mxu0
      %v2202 = vadd.f32 %v2049, %v2201
      %v2203 = vpop.f32.mrb[0].mxu0
      %v2204 = vadd.f32 %v2051, %v2203
      %v2205 = vpop.f32.mrb[0].mxu0
      %v2206 = vadd.f32 %v2053, %v2205
      %2207 = vmatprep.mubr.bf16.mxu0 %v1445
      %2208 = vmatmul.mubr.bf16.gmra.mrb[0].mxu0 %v1444
      %v2209 = vpop.f32.mrb[0].mxu0
      %v2210 = vadd.f32 %v2057, %v2209
      %v2211 = vpop.f32.mrb[0].mxu0
      %v2212 = vadd.f32 %v2059, %v2211
      %v2213 = vpop.f32.mrb[0].mxu0
      %v2214 = vadd.f32 %v2061, %v2213
      %v2215 = vpop.f32.mrb[0].mxu0
      %v2216 = vadd.f32 %v2063, %v2215
      %2217 = vmatprep.mubr.bf16.mxu0 %v1457
      %2218 = vmatmul.mubr.bf16.gmra.mrb[0].mxu0 %v1456
      %v2219 = vpop.f32.mrb[0].mxu0
      %v2220 = vadd.f32 %v2067, %v2219
      %v2221 = vpop.f32.mrb[0].mxu0
      %v2222 = vadd.f32 %v2069, %v2221
      %v2223 = vpop.f32.mrb[0].mxu0
      %v2224 = vadd.f32 %v2071, %v2223
      %v2225 = vpop.f32.mrb[0].mxu0
      %v2226 = vadd.f32 %v2073, %v2225
      %2227 = vmatprep.mubr.bf16.mxu0 %v1469
      %2228 = vmatmul.mubr.bf16.gmra.mrb[0].mxu0 %v1468
      %v2229 = vpop.f32.mrb[0].mxu0
      %v2230 = vadd.f32 %v2077, %v2229
      %v2231 = vpop.f32.mrb[0].mxu0
      %v2232 = vadd.f32 %v2079, %v2231
      %v2233 = vpop.f32.mrb[0].mxu0
      %v2234 = vadd.f32 %v2081, %v2233
      %v2235 = vpop.f32.mrb[0].mxu0
      %v2236 = vadd.f32 %v2083, %v2235
      %2237 = vmatprep.mubr.bf16.mxu0 %v1481
      %2238 = vmatmul.mubr.bf16.gmra.mrb[0].mxu0 %v1480
      %v2239 = vpop.f32.mrb[0].mxu0
      %v2240 = vadd.f32 %v2087, %v2239
      %v2241 = vpop.f32.mrb[0].mxu0
      %v2242 = vadd.f32 %v2089, %v2241
      %v2243 = vpop.f32.mrb[0].mxu0
      %v2244 = vadd.f32 %v2091, %v2243
      %v2245 = vpop.f32.mrb[0].mxu0
      %v2246 = vadd.f32 %v2093, %v2245
      %2247 = vmatprep.mubr.bf16.mxu0 %v1493
      %2248 = vmatmul.mubr.bf16.gmra.mrb[0].mxu0 %v1492
      %v2249 = vpop.f32.mrb[0].mxu0
      %v2250 = vadd.f32 %v2097, %v2249
      %v2251 = vpop.f32.mrb[0].mxu0
      %v2252 = vadd.f32 %v2099, %v2251
      %v2253 = vpop.f32.mrb[0].mxu0
      %v2254 = vadd.f32 %v2101, %v2253
      %v2255 = vpop.f32.mrb[0].mxu0
      %v2256 = vadd.f32 %v2103, %v2255
      %2257 = vmatprep.mubr.bf16.mxu0 %v1505
      %2258 = vmatmul.mubr.bf16.gmra.mrb[0].mxu0 %v1504
      %v2259 = vpop.f32.mrb[0].mxu0
      %v2260 = vadd.f32 %v2107, %v2259
      %v2261 = vpop.f32.mrb[0].mxu0
      %v2262 = vadd.f32 %v2109, %v2261
      %v2263 = vpop.f32.mrb[0].mxu0
      %v2264 = vadd.f32 %v2111, %v2263
      %v2265 = vpop.f32.mrb[0].mxu0
      %v2266 = vadd.f32 %v2113, %v2265
      %2267 = vmatprep.mubr.bf16.mxu0 %v1517
      %2268 = vmatmul.mubr.bf16.gmra.mrb[0].mxu0 %v1516
      %v2269 = vpop.f32.mrb[0].mxu0
      %v2270 = vadd.f32 %v2117, %v2269
      %v2271 = vpop.f32.mrb[0].mxu0
      %v2272 = vadd.f32 %v2119, %v2271
      %v2273 = vpop.f32.mrb[0].mxu0
      %v2274 = vadd.f32 %v2121, %v2273
      %v2275 = vpop.f32.mrb[0].mxu0
      %v2276 = vadd.f32 %v2123, %v2275
      %2277 = vdwg.mxu0
      %2278 = vmatprep.subr.bf16.mxu0 %v511
      %2279 = vmatpush1.bf16.xpose.msra.mxu0 %v510
      %2280 = vmatprep.subr.bf16.mxu0 %v523
      %2281 = vmatpush1.bf16.xpose.msra.mxu0 %v522
      %2282 = vmatprep.subr.bf16.mxu0 %v535
      %2283 = vmatpush1.bf16.xpose.msra.mxu0 %v534
      %2284 = vmatprep.subr.bf16.mxu0 %v547
      %2285 = vmatpush1.bf16.xpose.msra.mxu0 %v546
      %2286 = vmatprep.subr.bf16.mxu0 %v559
      %2287 = vmatpush1.bf16.xpose.msra.mxu0 %v558
      %2288 = vmatprep.subr.bf16.mxu0 %v571
      %2289 = vmatpush1.bf16.xpose.msra.mxu0 %v570
      %2290 = vmatprep.subr.bf16.mxu0 %v583
      %2291 = vmatpush1.bf16.xpose.msra.mxu0 %v582
      %2292 = vmatprep.subr.bf16.mxu0 %v595
      %2293 = vmatpush1.bf16.xpose.msra.mxu0 %v594
      %2294 = vmatprep.subr.bf16.mxu0 %v607
      %2295 = vmatpush1.bf16.xpose.msra.mxu0 %v606
      %2296 = vmatprep.subr.bf16.mxu0 %v619
      %2297 = vmatpush1.bf16.xpose.msra.mxu0 %v618
      %2298 = vmatprep.subr.bf16.mxu0 %v631
      %2299 = vmatpush1.bf16.xpose.msra.mxu0 %v630
      %2300 = vmatprep.subr.bf16.mxu0 %v643
      %2301 = vmatpush1.bf16.xpose.msra.mxu0 %v642
      %2302 = vmatprep.subr.bf16.mxu0 %v655
      %2303 = vmatpush1.bf16.xpose.msra.mxu0 %v654
      %2304 = vmatprep.subr.bf16.mxu0 0
      %2305 = vmatpush1.bf16.xpose.msra.mxu0 0
      %2306 = vmatprep.subr.bf16.mxu0 0
      %2307 = vmatpush1.bf16.xpose.msra.mxu0 0
      %2308 = vmatprep.subr.bf16.mxu0 0
      %2309 = vmatpush1.bf16.xpose.msra.mxu0 0
      %2310 = vmatprep.mubr.bf16.mxu0 %v1387
      %2311 = vmatmul.mubr.bf16.gmra.mrb[0].mxu0 %v1386
      %v2312 = vpop.f32.mrb[0].mxu0
      %v2313 = vadd.f32 %v2160, %v2312
      %v2314 = vpop.f32.mrb[0].mxu0
      %v2315 = vadd.f32 %v2162, %v2314
      %v2316 = vpop.f32.mrb[0].mxu0
      %v2317 = vadd.f32 %v2164, %v2316
      %v2318 = vpop.f32.mrb[0].mxu0
      %v2319 = vadd.f32 %v2166, %v2318
      %2320 = vmatprep.mubr.bf16.mxu0 %v1399
      %2321 = vmatmul.mubr.bf16.gmra.mrb[0].mxu0 %v1398
      %v2322 = vpop.f32.mrb[0].mxu0
      %v2323 = vadd.f32 %v2170, %v2322
      %v2324 = vpop.f32.mrb[0].mxu0
      %v2325 = vadd.f32 %v2172, %v2324
      %v2326 = vpop.f32.mrb[0].mxu0
      %v2327 = vadd.f32 %v2174, %v2326
      %v2328 = vpop.f32.mrb[0].mxu0
      %v2329 = vadd.f32 %v2176, %v2328
      %2330 = vmatprep.mubr.bf16.mxu0 %v1411
      %2331 = vmatmul.mubr.bf16.gmra.mrb[0].mxu0 %v1410
      %v2332 = vpop.f32.mrb[0].mxu0
      %v2333 = vadd.f32 %v2180, %v2332
      %v2334 = vpop.f32.mrb[0].mxu0
      %v2335 = vadd.f32 %v2182, %v2334
      %v2336 = vpop.f32.mrb[0].mxu0
      %v2337 = vadd.f32 %v2184, %v2336
      %v2338 = vpop.f32.mrb[0].mxu0
      %v2339 = vadd.f32 %v2186, %v2338
      %2340 = vmatprep.mubr.bf16.mxu0 %v1423
      %2341 = vmatmul.mubr.bf16.gmra.mrb[0].mxu0 %v1422
      %v2342 = vpop.f32.mrb[0].mxu0
      %v2343 = vadd.f32 %v2190, %v2342
      %v2344 = vpop.f32.mrb[0].mxu0
      %v2345 = vadd.f32 %v2192, %v2344
      %v2346 = vpop.f32.mrb[0].mxu0
      %v2347 = vadd.f32 %v2194, %v2346
      %v2348 = vpop.f32.mrb[0].mxu0
      %v2349 = vadd.f32 %v2196, %v2348
      %2350 = vmatprep.mubr.bf16.mxu0 %v1435
      %2351 = vmatmul.mubr.bf16.gmra.mrb[0].mxu0 %v1434
      %v2352 = vpop.f32.mrb[0].mxu0
      %v2353 = vadd.f32 %v2200, %v2352
      %v2354 = vpop.f32.mrb[0].mxu0
      %v2355 = vadd.f32 %v2202, %v2354
      %v2356 = vpop.f32.mrb[0].mxu0
      %v2357 = vadd.f32 %v2204, %v2356
      %v2358 = vpop.f32.mrb[0].mxu0
      %v2359 = vadd.f32 %v2206, %v2358
      %2360 = vmatprep.mubr.bf16.mxu0 %v1447
      %2361 = vmatmul.mubr.bf16.gmra.mrb[0].mxu0 %v1446
      %v2362 = vpop.f32.mrb[0].mxu0
      %v2363 = vadd.f32 %v2210, %v2362
      %v2364 = vpop.f32.mrb[0].mxu0
      %v2365 = vadd.f32 %v2212, %v2364
      %v2366 = vpop.f32.mrb[0].mxu0
      %v2367 = vadd.f32 %v2214, %v2366
      %v2368 = vpop.f32.mrb[0].mxu0
      %v2369 = vadd.f32 %v2216, %v2368
      %2370 = vmatprep.mubr.bf16.mxu0 %v1459
      %2371 = vmatmul.mubr.bf16.gmra.mrb[0].mxu0 %v1458
      %v2372 = vpop.f32.mrb[0].mxu0
      %v2373 = vadd.f32 %v2220, %v2372
      %v2374 = vpop.f32.mrb[0].mxu0
      %v2375 = vadd.f32 %v2222, %v2374
      %v2376 = vpop.f32.mrb[0].mxu0
      %v2377 = vadd.f32 %v2224, %v2376
      %v2378 = vpop.f32.mrb[0].mxu0
      %v2379 = vadd.f32 %v2226, %v2378
      %2380 = vmatprep.mubr.bf16.mxu0 %v1471
      %2381 = vmatmul.mubr.bf16.gmra.mrb[0].mxu0 %v1470
      %v2382 = vpop.f32.mrb[0].mxu0
      %v2383 = vadd.f32 %v2230, %v2382
      %v2384 = vpop.f32.mrb[0].mxu0
      %v2385 = vadd.f32 %v2232, %v2384
      %v2386 = vpop.f32.mrb[0].mxu0
      %v2387 = vadd.f32 %v2234, %v2386
      %v2388 = vpop.f32.mrb[0].mxu0
      %v2389 = vadd.f32 %v2236, %v2388
      %2390 = vmatprep.mubr.bf16.mxu0 %v1483
      %2391 = vmatmul.mubr.bf16.gmra.mrb[0].mxu0 %v1482
      %v2392 = vpop.f32.mrb[0].mxu0
      %v2393 = vadd.f32 %v2240, %v2392
      %v2394 = vpop.f32.mrb[0].mxu0
      %v2395 = vadd.f32 %v2242, %v2394
      %v2396 = vpop.f32.mrb[0].mxu0
      %v2397 = vadd.f32 %v2244, %v2396
      %v2398 = vpop.f32.mrb[0].mxu0
      %v2399 = vadd.f32 %v2246, %v2398
      %2400 = vmatprep.mubr.bf16.mxu0 %v1495
      %2401 = vmatmul.mubr.bf16.gmra.mrb[0].mxu0 %v1494
      %v2402 = vpop.f32.mrb[0].mxu0
      %v2403 = vadd.f32 %v2250, %v2402
      %v2404 = vpop.f32.mrb[0].mxu0
      %v2405 = vadd.f32 %v2252, %v2404
      %v2406 = vpop.f32.mrb[0].mxu0
      %v2407 = vadd.f32 %v2254, %v2406
      %v2408 = vpop.f32.mrb[0].mxu0
      %v2409 = vadd.f32 %v2256, %v2408
      %2410 = vmatprep.mubr.bf16.mxu0 %v1507
      %2411 = vmatmul.mubr.bf16.gmra.mrb[0].mxu0 %v1506
      %v2412 = vpop.f32.mrb[0].mxu0
      %v2413 = vadd.f32 %v2260, %v2412
      %v2414 = vpop.f32.mrb[0].mxu0
      %v2415 = vadd.f32 %v2262, %v2414
      %v2416 = vpop.f32.mrb[0].mxu0
      %v2417 = vadd.f32 %v2264, %v2416
      %v2418 = vpop.f32.mrb[0].mxu0
      %v2419 = vadd.f32 %v2266, %v2418
      %2420 = vmatprep.mubr.bf16.mxu0 %v1519
      %2421 = vmatmul.mubr.bf16.gmra.mrb[0].mxu0 %v1518
      %v2422 = vpop.f32.mrb[0].mxu0
      %v2423 = vadd.f32 %v2270, %v2422
      %v2424 = vpop.f32.mrb[0].mxu0
      %v2425 = vadd.f32 %v2272, %v2424
      %v2426 = vpop.f32.mrb[0].mxu0
      %v2427 = vadd.f32 %v2274, %v2426
      %v2428 = vpop.f32.mrb[0].mxu0
      %v2429 = vadd.f32 %v2276, %v2428
      %2430 = vdwg.mxu0
      %2431 = vmatprep.subr.bf16.mxu0 %v513
      %2432 = vmatpush1.bf16.xpose.msra.mxu0 %v512
      %2433 = vmatprep.subr.bf16.mxu0 %v525
      %2434 = vmatpush1.bf16.xpose.msra.mxu0 %v524
      %2435 = vmatprep.subr.bf16.mxu0 %v537
      %2436 = vmatpush1.bf16.xpose.msra.mxu0 %v536
      %2437 = vmatprep.subr.bf16.mxu0 %v549
      %2438 = vmatpush1.bf16.xpose.msra.mxu0 %v548
      %2439 = vmatprep.subr.bf16.mxu0 %v561
      %2440 = vmatpush1.bf16.xpose.msra.mxu0 %v560
      %2441 = vmatprep.subr.bf16.mxu0 %v573
      %2442 = vmatpush1.bf16.xpose.msra.mxu0 %v572
      %2443 = vmatprep.subr.bf16.mxu0 %v585
      %2444 = vmatpush1.bf16.xpose.msra.mxu0 %v584
      %2445 = vmatprep.subr.bf16.mxu0 %v597
      %2446 = vmatpush1.bf16.xpose.msra.mxu0 %v596
      %2447 = vmatprep.subr.bf16.mxu0 %v609
      %2448 = vmatpush1.bf16.xpose.msra.mxu0 %v608
      %2449 = vmatprep.subr.bf16.mxu0 %v621
      %2450 = vmatpush1.bf16.xpose.msra.mxu0 %v620
      %2451 = vmatprep.subr.bf16.mxu0 %v633
      %2452 = vmatpush1.bf16.xpose.msra.mxu0 %v632
      %2453 = vmatprep.subr.bf16.mxu0 %v645
      %2454 = vmatpush1.bf16.xpose.msra.mxu0 %v644
      %2455 = vmatprep.subr.bf16.mxu0 %v657
      %2456 = vmatpush1.bf16.xpose.msra.mxu0 %v656
      %2457 = vmatprep.subr.bf16.mxu0 0
      %2458 = vmatpush1.bf16.xpose.msra.mxu0 0
      %2459 = vmatprep.subr.bf16.mxu0 0
      %2460 = vmatpush1.bf16.xpose.msra.mxu0 0
      %2461 = vmatprep.subr.bf16.mxu0 0
      %2462 = vmatpush1.bf16.xpose.msra.mxu0 0
      %2463 = vmatprep.mubr.bf16.mxu0 %v1389
      %2464 = vmatmul.mubr.bf16.gmra.mrb[0].mxu0 %v1388
      %v2465 = vpop.f32.mrb[0].mxu0
      %v2466 = vadd.f32 %v2313, %v2465
      %v2467 = vpop.f32.mrb[0].mxu0
      %v2468 = vadd.f32 %v2315, %v2467
      %v2469 = vpop.f32.mrb[0].mxu0
      %v2470 = vadd.f32 %v2317, %v2469
      %v2471 = vpop.f32.mrb[0].mxu0
      %v2472 = vadd.f32 %v2319, %v2471
      %2473 = vmatprep.mubr.bf16.mxu0 %v1401
      %2474 = vmatmul.mubr.bf16.gmra.mrb[0].mxu0 %v1400
      %v2475 = vpop.f32.mrb[0].mxu0
      %v2476 = vadd.f32 %v2323, %v2475
      %v2477 = vpop.f32.mrb[0].mxu0
      %v2478 = vadd.f32 %v2325, %v2477
      %v2479 = vpop.f32.mrb[0].mxu0
      %v2480 = vadd.f32 %v2327, %v2479
      %v2481 = vpop.f32.mrb[0].mxu0
      %v2482 = vadd.f32 %v2329, %v2481
      %2483 = vmatprep.mubr.bf16.mxu0 %v1413
      %2484 = vmatmul.mubr.bf16.gmra.mrb[0].mxu0 %v1412
      %v2485 = vpop.f32.mrb[0].mxu0
      %v2486 = vadd.f32 %v2333, %v2485
      %v2487 = vpop.f32.mrb[0].mxu0
      %v2488 = vadd.f32 %v2335, %v2487
      %v2489 = vpop.f32.mrb[0].mxu0
      %v2490 = vadd.f32 %v2337, %v2489
      %v2491 = vpop.f32.mrb[0].mxu0
      %v2492 = vadd.f32 %v2339, %v2491
      %2493 = vmatprep.mubr.bf16.mxu0 %v1425
      %2494 = vmatmul.mubr.bf16.gmra.mrb[0].mxu0 %v1424
      %v2495 = vpop.f32.mrb[0].mxu0
      %v2496 = vadd.f32 %v2343, %v2495
      %v2497 = vpop.f32.mrb[0].mxu0
      %v2498 = vadd.f32 %v2345, %v2497
      %v2499 = vpop.f32.mrb[0].mxu0
      %v2500 = vadd.f32 %v2347, %v2499
      %v2501 = vpop.f32.mrb[0].mxu0
      %v2502 = vadd.f32 %v2349, %v2501
      %2503 = vmatprep.mubr.bf16.mxu0 %v1437
      %2504 = vmatmul.mubr.bf16.gmra.mrb[0].mxu0 %v1436
      %v2505 = vpop.f32.mrb[0].mxu0
      %v2506 = vadd.f32 %v2353, %v2505
      %v2507 = vpop.f32.mrb[0].mxu0
      %v2508 = vadd.f32 %v2355, %v2507
      %v2509 = vpop.f32.mrb[0].mxu0
      %v2510 = vadd.f32 %v2357, %v2509
      %v2511 = vpop.f32.mrb[0].mxu0
      %v2512 = vadd.f32 %v2359, %v2511
      %2513 = vmatprep.mubr.bf16.mxu0 %v1449
      %2514 = vmatmul.mubr.bf16.gmra.mrb[0].mxu0 %v1448
      %v2515 = vpop.f32.mrb[0].mxu0
      %v2516 = vadd.f32 %v2363, %v2515
      %v2517 = vpop.f32.mrb[0].mxu0
      %v2518 = vadd.f32 %v2365, %v2517
      %v2519 = vpop.f32.mrb[0].mxu0
      %v2520 = vadd.f32 %v2367, %v2519
      %v2521 = vpop.f32.mrb[0].mxu0
      %v2522 = vadd.f32 %v2369, %v2521
      %2523 = vmatprep.mubr.bf16.mxu0 %v1461
      %2524 = vmatmul.mubr.bf16.gmra.mrb[0].mxu0 %v1460
      %v2525 = vpop.f32.mrb[0].mxu0
      %v2526 = vadd.f32 %v2373, %v2525
      %v2527 = vpop.f32.mrb[0].mxu0
      %v2528 = vadd.f32 %v2375, %v2527
      %v2529 = vpop.f32.mrb[0].mxu0
      %v2530 = vadd.f32 %v2377, %v2529
      %v2531 = vpop.f32.mrb[0].mxu0
      %v2532 = vadd.f32 %v2379, %v2531
      %2533 = vmatprep.mubr.bf16.mxu0 %v1473
      %2534 = vmatmul.mubr.bf16.gmra.mrb[0].mxu0 %v1472
      %v2535 = vpop.f32.mrb[0].mxu0
      %v2536 = vadd.f32 %v2383, %v2535
      %v2537 = vpop.f32.mrb[0].mxu0
      %v2538 = vadd.f32 %v2385, %v2537
      %v2539 = vpop.f32.mrb[0].mxu0
      %v2540 = vadd.f32 %v2387, %v2539
      %v2541 = vpop.f32.mrb[0].mxu0
      %v2542 = vadd.f32 %v2389, %v2541
      %2543 = vmatprep.mubr.bf16.mxu0 %v1485
      %2544 = vmatmul.mubr.bf16.gmra.mrb[0].mxu0 %v1484
      %v2545 = vpop.f32.mrb[0].mxu0
      %v2546 = vadd.f32 %v2393, %v2545
      %v2547 = vpop.f32.mrb[0].mxu0
      %v2548 = vadd.f32 %v2395, %v2547
      %v2549 = vpop.f32.mrb[0].mxu0
      %v2550 = vadd.f32 %v2397, %v2549
      %v2551 = vpop.f32.mrb[0].mxu0
      %v2552 = vadd.f32 %v2399, %v2551
      %2553 = vmatprep.mubr.bf16.mxu0 %v1497
      %2554 = vmatmul.mubr.bf16.gmra.mrb[0].mxu0 %v1496
      %v2555 = vpop.f32.mrb[0].mxu0
      %v2556 = vadd.f32 %v2403, %v2555
      %v2557 = vpop.f32.mrb[0].mxu0
      %v2558 = vadd.f32 %v2405, %v2557
      %v2559 = vpop.f32.mrb[0].mxu0
      %v2560 = vadd.f32 %v2407, %v2559
      %v2561 = vpop.f32.mrb[0].mxu0
      %v2562 = vadd.f32 %v2409, %v2561
      %2563 = vmatprep.mubr.bf16.mxu0 %v1509
      %2564 = vmatmul.mubr.bf16.gmra.mrb[0].mxu0 %v1508
      %v2565 = vpop.f32.mrb[0].mxu0
      %v2566 = vadd.f32 %v2413, %v2565
      %v2567 = vpop.f32.mrb[0].mxu0
      %v2568 = vadd.f32 %v2415, %v2567
      %v2569 = vpop.f32.mrb[0].mxu0
      %v2570 = vadd.f32 %v2417, %v2569
      %v2571 = vpop.f32.mrb[0].mxu0
      %v2572 = vadd.f32 %v2419, %v2571
      %2573 = vmatprep.mubr.bf16.mxu0 %v1521
      %2574 = vmatmul.mubr.bf16.gmra.mrb[0].mxu0 %v1520
      %v2575 = vpop.f32.mrb[0].mxu0
      %v2576 = vadd.f32 %v2423, %v2575
      %v2577 = vpop.f32.mrb[0].mxu0
      %v2578 = vadd.f32 %v2425, %v2577
      %v2579 = vpop.f32.mrb[0].mxu0
      %v2580 = vadd.f32 %v2427, %v2579
      %v2581 = vpop.f32.mrb[0].mxu0
      %v2582 = vadd.f32 %v2429, %v2581
      %2583 = vdwg.mxu0
      %2584 = vst [vmem:[%s199] sm:$0xff] %v2466
      %vm2585 = vcmask 556032
      %2586 = vst.msk [vmem:[%s199 + $0x8] sm:$0xff] %vm2585, %v2468
      %2587 = vst [vmem:[%s199 + $0x10] sm:$0xff] %v2470
      %2588 = vst.msk [vmem:[%s199 + $0x18] sm:$0xff] %vm2585, %v2472
      %2589 = vst [vmem:[%s199 + $0x20] sm:$0xff] %v2476
      %2590 = vst.msk [vmem:[%s199 + $0x28] sm:$0xff] %vm2585, %v2478
      %2591 = vst [vmem:[%s199 + $0x30] sm:$0xff] %v2480
      %2592 = vst.msk [vmem:[%s199 + $0x38] sm:$0xff] %vm2585, %v2482
      %2593 = vst [vmem:[%s199 + $0x40] sm:$0xff] %v2486
      %2594 = vst.msk [vmem:[%s199 + $0x48] sm:$0xff] %vm2585, %v2488
      %2595 = vst [vmem:[%s199 + $0x50] sm:$0xff] %v2490
      %2596 = vst.msk [vmem:[%s199 + $0x58] sm:$0xff] %vm2585, %v2492
      %2597 = vst [vmem:[%s199 + $0x60] sm:$0xff] %v2496
      %2598 = vst.msk [vmem:[%s199 + $0x68] sm:$0xff] %vm2585, %v2498
      %2599 = vst [vmem:[%s199 + $0x70] sm:$0xff] %v2500
      %2600 = vst.msk [vmem:[%s199 + $0x78] sm:$0xff] %vm2585, %v2502
      %2601 = vst [vmem:[%s199 + $0x80] sm:$0xff] %v2506
      %2602 = vst.msk [vmem:[%s199 + $0x88] sm:$0xff] %vm2585, %v2508
      %2603 = vst [vmem:[%s199 + $0x90] sm:$0xff] %v2510
      %2604 = vst.msk [vmem:[%s199 + $0x98] sm:$0xff] %vm2585, %v2512
      %2605 = vst [vmem:[%s199 + $0xa0] sm:$0xff] %v2516
      %2606 = vst.msk [vmem:[%s199 + $0xa8] sm:$0xff] %vm2585, %v2518
      %2607 = vst [vmem:[%s199 + $0xb0] sm:$0xff] %v2520
      %2608 = vst.msk [vmem:[%s199 + $0xb8] sm:$0xff] %vm2585, %v2522
      %2609 = vst [vmem:[%s199 + $0xc0] sm:$0xff] %v2526
      %2610 = vst.msk [vmem:[%s199 + $0xc8] sm:$0xff] %vm2585, %v2528
      %2611 = vst [vmem:[%s199 + $0xd0] sm:$0xff] %v2530
      %2612 = vst.msk [vmem:[%s199 + $0xd8] sm:$0xff] %vm2585, %v2532
      %2613 = vst [vmem:[%s199 + $0xe0] sm:$0xff] %v2536
      %2614 = vst.msk [vmem:[%s199 + $0xe8] sm:$0xff] %vm2585, %v2538
      %2615 = vst [vmem:[%s199 + $0xf0] sm:$0xff] %v2540
      %2616 = vst.msk [vmem:[%s199 + $0xf8] sm:$0xff] %vm2585, %v2542
      %2617 = vst [vmem:[%s199 + $0x100] sm:$0xff] %v2546
      %2618 = vst.msk [vmem:[%s199 + $0x108] sm:$0xff] %vm2585, %v2548
      %2619 = vst [vmem:[%s199 + $0x110] sm:$0xff] %v2550
      %2620 = vst.msk [vmem:[%s199 + $0x118] sm:$0xff] %vm2585, %v2552
      %2621 = vst [vmem:[%s199 + $0x120] sm:$0xff] %v2556
      %2622 = vst.msk [vmem:[%s199 + $0x128] sm:$0xff] %vm2585, %v2558
      %2623 = vst [vmem:[%s199 + $0x130] sm:$0xff] %v2560
      %2624 = vst.msk [vmem:[%s199 + $0x138] sm:$0xff] %vm2585, %v2562
      %2625 = vst [vmem:[%s199 + $0x140] sm:$0xff] %v2566
      %2626 = vst.msk [vmem:[%s199 + $0x148] sm:$0xff] %vm2585, %v2568
      %2627 = vst [vmem:[%s199 + $0x150] sm:$0xff] %v2570
      %2628 = vst.msk [vmem:[%s199 + $0x158] sm:$0xff] %vm2585, %v2572
      %2629 = vst [vmem:[%s199 + $0x160] sm:$0xff] %v2576
      %2630 = vst.msk [vmem:[%s199 + $0x168] sm:$0xff] %vm2585, %v2578
      %2631 = vst [vmem:[%s199 + $0x170] sm:$0xff] %v2580
      %2632 = vst.msk [vmem:[%s199 + $0x178] sm:$0xff] %vm2585, %v2582
      %s2633 = smul.u32 24, %s14
      %p2634 = scmp.lt.s32.totalorder %s2633, 47
      %s2635 = scalar_select %p2634, %s2633, 47
      %s2636 = smul.addr %s2635, 2
      %s2637 = smul.addr %s2636, 8
      %s2638 = scalar_lea.vmem %s3, %s2637
      // Predicated region
      $region33: #{linear_permute.1} parent=31 // pred_check
        %p2639 = pneg %p105
      $region34: #{linear_permute.1} parent=31 // pred_check_branch
        %2641 = sbr.rel (%p2639) target = $region36
      $region35: #{linear_permute.1} parent=31 // pred_region
        %s2642 = smul.u32 24, %s14
      $region36: #{linear_permute.1} parent=31 // pred_fallthru
        _
    $region32: #{linear_permute.1} parent=5 // pred_fallthru
      _
    %p2643 = scmp.le.s32.totalorder 2, %s9
    // Predicated region
    $region37: #{linear_permute.1} parent=5 // pred_check
      %p2644 = pneg %p2643
    $region38: #{linear_permute.1} parent=5 // pred_check_branch
      %2646 = sbr.rel (%p2644) target = $region40
    $region39: #{linear_permute.1} parent=5 // pred_region
      %s2647 = ssub.s32 %s9, 2
      // Predicated region
      $region41: #{linear_permute.1} parent=39 // pred_check
        %p2648 = pneg %p111
      $region42: #{linear_permute.1} parent=39 // pred_check_branch
        %2650 = sbr.rel (%p2648) target = $region44
      $region43: #{linear_permute.1} parent=39 // pred_region
        %s2651 = smul.u32 24, %s15
        %p2652 = scmp.lt.s32.totalorder %s2651, 47
        %s2653 = scalar_select %p2652, %s2651, 47
        %s2654 = smul.addr %s2653, 2
        %s2655 = smul.addr %s2654, 8
        %s2656 = scalar_lea.vmem %s3, %s2655
      $region44: #{linear_permute.1} parent=39 // pred_fallthru
        _
    $region40: #{linear_permute.1} parent=5 // pred_fallthru
      _
  $region6: #{linear_permute.1} parent=0 // loop_footer
    %s13 = sadd.s32 1, %s9
  $region7: #{linear_permute.1} parent=0 // loop_footer_branch
    %8 = sbr.rel target = $region3
  $region8: #{linear_permute.1} parent=0 // loop_exit
    _

</llo_original>
